<compile_context>
chip_gen: v7x
topology: tpu7x:2x2x1
jax: 0.10.0
libtpu: 0.0.40
codegen_flags: <defaults>
</compile_context>

<pallas_src>
import functools
import math

import jax
import jax.numpy as jnp
from jax import lax
from jax.experimental import pallas as pl
from jax.experimental.pallas import tpu as pltpu

# --------------------------------------------------------------------------
# Small (but structurally faithful) hyper-parameters.
# PyTorch defaults: f_dim=2048, f_maps=32, classes=7, len_q=30.
# --------------------------------------------------------------------------
MSTCN_F_DIM = 256      # feature dim fed to the fc layer (shrunk from 2048)
MSTCN_F_MAPS = 32      # d_ff = d_k = d_v
OUT_FEATURES = 7       # number of classes = d_model
LEN_Q = 8              # temporal window length (shrunk from 30)
N_HEADS = 8
SEQ_T = 8              # number of frames in the clip


def _layer_norm(x, gamma, beta, eps=1e-5):
    """nn.LayerNorm over the last dim (biased variance, eps=1e-5)."""
    mu = jnp.mean(x, axis=-1, keepdims=True)
    diff = x - mu
    var = jnp.mean(diff * diff, axis=-1, keepdims=True)
    return diff * lax.rsqrt(var + eps) * gamma + beta


# --------------------------------------------------------------------------
# Fused kernel: feas = tanh(long_feature @ W_fc), then one decoder layer for
# all T frames at once (banded multi-head cross-attention + FFN).
# --------------------------------------------------------------------------
def _fused_transformer_kernel(lf_ref, wfc_ref, logits_ref,
                              wq_ref, wkv_ref, wo_ref,
                              w1_ref, w2_ref, ln_g_ref, ln_b_ref, out_ref, *,
                              n_heads, d_k, len_q):
    f32 = jnp.float32
    T, d_model = out_ref.shape
    t_pad = logits_ref.shape[0]                 # T + len_q - 1
    hd = n_heads * d_k                          # fused head dim (=256)

    # 1) Spatial embedding: feas = tanh(long_feature @ W_fc^T).
    #    bf16 operands, f32 accumulation on the MXU.
    feas = jnp.tanh(jnp.dot(lf_ref[...], wfc_ref[...],
                            preferred_element_type=f32))            # (T, C)

    logits = logits_ref[...]                                        # (Tp, C)

    # 2) Fused projections: single wide 2D matmuls (no per-head batching,
    #    no broadcast_to).  K and V come from one (C, 2*hd) matmul.
    scale = 1.0 / math.sqrt(d_k)
    q = jnp.dot(feas, wq_ref[...], preferred_element_type=f32) * scale  # (T, hd)
    kv = jnp.dot(logits, wkv_ref[...], preferred_element_type=f32)      # (Tp, 2hd)
    k = kv[:, :hd]
    v = kv[:, hd:]

    # 3) Banded multi-head attention: frame t attends to padded positions
    #    [t, t + len_q) -- exactly the len_q window of the PyTorch module.
    #    Zero front-padding rows still receive softmax weight, matching the
    #    reference's zero-filled early windows (no key mask is applied there).
    t_idx = lax.broadcasted_iota(jnp.int32, (T, t_pad), 0)
    p_idx = lax.broadcasted_iota(jnp.int32, (T, t_pad), 1)
    in_band = (p_idx >= t_idx) & (p_idx < t_idx + len_q)             # (T, Tp)

    ctx_parts = []
    for h in range(n_heads):                    # static unroll; tiles are tiny
        lo = h * d_k
        qh = q[:, lo:lo + d_k]                  # (T, dk)
        kh = k[:, lo:lo + d_k]                  # (Tp, dk)
        vh = v[:, lo:lo + d_k]                  # (Tp, dk)
        s = lax.dot_general(qh, kh, (((1,), (1,)), ((), ())),
                            preferred_element_type=f32)             # (T, Tp)
        s = jnp.where(in_band, s, -1e30)
        s = s - jnp.max(s, axis=-1, keepdims=True)
        e = jnp.exp(s)
        a = e * pl.reciprocal(jnp.sum(e, axis=-1, keepdims=True), approx=True)
        ctx_parts.append(jnp.dot(a, vh, preferred_element_type=f32))  # (T, dk)

    # concat-of-heads, then ONE output projection matmul (T, hd) @ (hd, C).
    ctx = jnp.concatenate(ctx_parts, axis=-1)                        # (T, hd)
    attn_out = jnp.dot(ctx, wo_ref[...], preferred_element_type=f32)  # (T, C)

    # 4) Residual + LayerNorm, position-wise FFN, residual + LayerNorm.
    x1 = _layer_norm(attn_out + feas, ln_g_ref[0:1, :], ln_b_ref[0:1, :])
    h1 = jnp.maximum(jnp.dot(x1, w1_ref[...], preferred_element_type=f32), 0.0)
    ffn = jnp.dot(h1, w2_ref[...], preferred_element_type=f32)
    out = _layer_norm(ffn + x1, ln_g_ref[1:2, :], ln_b_ref[1:2, :])

    out_ref[...] = out.astype(out_ref.dtype)


# --------------------------------------------------------------------------
# Wrapper: layout plumbing in plain JAX, all compute in one fused kernel.
# --------------------------------------------------------------------------
def transformer_forward(x, long_feature, params, *, len_q, num_classes,
                        n_heads, d_k):
    B, C, T = x.shape
    assert B == 1 and C == num_classes
    t_pad = T + len_q - 1
    hd = n_heads * d_k

    # Temporal logits, zero-padded at the front (len_q-1 rows) -- no
    # (T, len_q, C) window gather: a banded mask in the kernel selects each
    # frame's window from this single padded sequence.
    of = jnp.transpose(x, (0, 2, 1))[0].astype(jnp.float32)          # (T, C)
    logits_pad = jnp.pad(of, ((len_q - 1, 0), (0, 0)))               # (Tp, C)

    # bf16 for the only non-trivial DMA (lf + w_fc); f32 accumulation in-kernel.
    lf = long_feature[0].astype(jnp.bfloat16)                        # (T, f_dim)
    w_fc = params["w_fc_t"].astype(jnp.bfloat16)                     # (f_dim, C)
    f_dim = lf.shape[1]

    # Weights stay UNPADDED (whole-array blocks are exempt from (8,128)).
    wq = params["wq"]                                                # (C, hd)
    wkv = jnp.concatenate([params["wk"], params["wv"]], axis=1)      # (C, 2hd)
    wo = params["wo"]                                                # (hd, C)
    w1 = params["w1"]                                                # (C, d_ff)
    w2 = params["w2"]                                                # (d_ff, C)
    d_ff = w1.shape[1]
    ln_g = jnp.stack([params["ln1_g"], params["ln2_g"]])             # (2, C)
    ln_b = jnp.stack([params["ln1_b"], params["ln2_b"]])             # (2, C)

    operands = (lf, w_fc, logits_pad, wq, wkv, wo, w1, w2, ln_g, ln_b)

    def full_spec(a):  # whole array as one VMEM-resident block
        return pl.BlockSpec(a.shape, lambda i, _nd=a.ndim: (0,) * _nd)

    kern = functools.partial(_fused_transformer_kernel, n_heads=n_heads,
                             d_k=d_k, len_q=len_q)

    # Advisory cost so XLA schedules the surrounding layout ops sensibly.
    flops = (2 * T * f_dim * C                  # fc
             + 2 * T * C * hd                   # Q
             + 2 * t_pad * C * 2 * hd           # K, V (fused)
             + 4 * n_heads * T * t_pad * d_k    # scores + ctx
             + 2 * T * hd * C                   # out projection
             + 4 * T * C * d_ff)                # FFN
    transcendentals = T * C + n_heads * T * t_pad
    bytes_accessed = (sum(int(a.size) * a.dtype.itemsize for a in operands)
                      + T * C * 4)
    cost = pl.CostEstimate(flops=flops, transcendentals=transcendentals,
                           bytes_accessed=bytes_accessed)

    # Single fused invocation: every operand is KBs, the whole problem sits in
    # VMEM -- no K-tiling, no grid over T, no per-frame pipelining.
    out = pl.pallas_call(
        kern,
        out_shape=jax.ShapeDtypeStruct((T, num_classes), jnp.float32),
        grid=(1,),
        in_specs=[full_spec(a) for a in operands],
        out_specs=pl.BlockSpec((T, num_classes), lambda i: (0, 0)),
        compiler_params=pltpu.CompilerParams(
            dimension_semantics=("arbitrary",)),
        cost_estimate=cost,
    )(*operands)

    # Restore the module's (T, 1, num_classes) output shape.
    return out[:, None, :]


def init_params(key, *, f_dim, f_maps, num_classes, n_heads):
    d_model, d_k = num_classes, f_maps
    ks = jax.random.split(key, 7)

    def lin(k, fan_in, shape):  # PyTorch-style uniform(-1/sqrt(fan_in), ...)
        bound = 1.0 / math.sqrt(fan_in)
        return jax.random.uniform(k, shape, jnp.float32, -bound, bound)

    return {
        "w_fc_t": lin(ks[0], f_dim, (f_dim, d_model)),              # fc (no bias)
        "wq": lin(ks[1], d_model, (d_model, n_heads * d_k)),        # W_Q
        "wk": lin(ks[2], d_model, (d_model, n_heads * d_k)),        # W_K
        "wv": lin(ks[3], d_model, (d_model, n_heads * d_k)),        # W_V
        "wo": lin(ks[4], n_heads * d_k, (n_heads * d_k, d_model)),  # MHA out proj
        "w1": lin(ks[5], d_model, (d_model, f_maps)),               # FFN layer 1
        "w2": lin(ks[6], f_maps, (f_maps, d_model)),                # FFN layer 2
        # LayerNorm affine params (fresh nn.LayerNorm init: gamma=1, beta=0).
        "ln1_g": jnp.ones((d_model,), jnp.float32),
        "ln1_b": jnp.zeros((d_model,), jnp.float32),
        "ln2_g": jnp.ones((d_model,), jnp.float32),
        "ln2_b": jnp.zeros((d_model,), jnp.float32),
    }


if __name__ == "__main__":
    key = jax.random.PRNGKey(0)
    kx, klf, kp = jax.random.split(key, 3)

    x = jax.random.normal(kx, (1, OUT_FEATURES, SEQ_T), jnp.float32)
    long_feature = jax.random.normal(klf, (1, SEQ_T, MSTCN_F_DIM), jnp.float32)
    params = init_params(kp, f_dim=MSTCN_F_DIM, f_maps=MSTCN_F_MAPS,
                         num_classes=OUT_FEATURES, n_heads=N_HEADS)

    out = transformer_forward(x, long_feature, params,
                              len_q=LEN_Q, num_classes=OUT_FEATURES,
                              n_heads=N_HEADS, d_k=MSTCN_F_MAPS)
    jax.block_until_ready(out)
    assert out.shape == (SEQ_T, 1, OUT_FEATURES)
    print("KERNEL_OK")
</pallas_src>

<mosaic_0001>
module attributes {stable_mosaic.version = 11 : i64} {
  func.func @_fused_transformer_kernel(%arg0: i32, %arg1: memref<8x256xbf16, #tpu.memory_space<vmem>>, %arg2: memref<256x7xbf16, #tpu.memory_space<vmem>>, %arg3: memref<15x7xf32, #tpu.memory_space<vmem>>, %arg4: memref<7x256xf32, #tpu.memory_space<vmem>>, %arg5: memref<7x512xf32, #tpu.memory_space<vmem>>, %arg6: memref<256x7xf32, #tpu.memory_space<vmem>>, %arg7: memref<7x32xf32, #tpu.memory_space<vmem>>, %arg8: memref<32x7xf32, #tpu.memory_space<vmem>>, %arg9: memref<2x7xf32, #tpu.memory_space<vmem>>, %arg10: memref<2x7xf32, #tpu.memory_space<vmem>>, %arg11: memref<8x7xf32, #tpu.memory_space<vmem>>) attributes {dimension_semantics = [#tpu.dimension_semantics<arbitrary>], iteration_bounds = array<i64: 1>, scalar_prefetch = 0 : i64, scratch_operands = 0 : i64, tpu.core_type = #tpu.core_type<tc>, window_params = [{pipeline_mode = #tpu.pipeline_mode<synchronous>, transform_indices = @transform_0, window_bounds = array<i64: 8, 256>}, {pipeline_mode = #tpu.pipeline_mode<synchronous>, transform_indices = @transform_1, window_bounds = array<i64: 256, 7>}, {pipeline_mode = #tpu.pipeline_mode<synchronous>, transform_indices = @transform_2, window_bounds = array<i64: 15, 7>}, {pipeline_mode = #tpu.pipeline_mode<synchronous>, transform_indices = @transform_3, window_bounds = array<i64: 7, 256>}, {pipeline_mode = #tpu.pipeline_mode<synchronous>, transform_indices = @transform_4, window_bounds = array<i64: 7, 512>}, {pipeline_mode = #tpu.pipeline_mode<synchronous>, transform_indices = @transform_5, window_bounds = array<i64: 256, 7>}, {pipeline_mode = #tpu.pipeline_mode<synchronous>, transform_indices = @transform_6, window_bounds = array<i64: 7, 32>}, {pipeline_mode = #tpu.pipeline_mode<synchronous>, transform_indices = @transform_7, window_bounds = array<i64: 32, 7>}, {pipeline_mode = #tpu.pipeline_mode<synchronous>, transform_indices = @transform_8, window_bounds = array<i64: 2, 7>}, {pipeline_mode = #tpu.pipeline_mode<synchronous>, transform_indices = @transform_9, window_bounds = array<i64: 2, 7>}, {pipeline_mode = #tpu.pipeline_mode<synchronous>, transform_indices = @transform_10, window_bounds = array<i64: 8, 7>}]} {
    %c0 = arith.constant 0 : index
    %c0_0 = arith.constant 0 : index
    %0 = vector.load %arg1[%c0, %c0_0] : memref<8x256xbf16, #tpu.memory_space<vmem>>, vector<8x256xbf16>
    %c0_1 = arith.constant 0 : index
    %c0_2 = arith.constant 0 : index
    %1 = vector.load %arg2[%c0_1, %c0_2] : memref<256x7xbf16, #tpu.memory_space<vmem>>, vector<256x7xbf16>
    %cst = arith.constant dense<0.000000e+00> : vector<8x7xf32>
    %2 = tpu.matmul %0, %1, %cst {dimension_numbers = #tpu.dot_dimension_numbers<[1], [0], [0], [1], [0, 0, 1, 1], [], []>} : vector<8x256xbf16>, vector<256x7xbf16>, vector<8x7xf32> -> vector<8x7xf32>
    %3 = math.tanh %2 : vector<8x7xf32>
    %c0_3 = arith.constant 0 : index
    %c0_4 = arith.constant 0 : index
    %4 = vector.load %arg3[%c0_3, %c0_4] : memref<15x7xf32, #tpu.memory_space<vmem>>, vector<15x7xf32>
    %c0_5 = arith.constant 0 : index
    %c0_6 = arith.constant 0 : index
    %5 = vector.load %arg4[%c0_5, %c0_6] : memref<7x256xf32, #tpu.memory_space<vmem>>, vector<7x256xf32>
    %cst_7 = arith.constant dense<0.000000e+00> : vector<8x256xf32>
    %6 = tpu.matmul %3, %5, %cst_7 {dimension_numbers = #tpu.dot_dimension_numbers<[1], [0], [0], [1], [0, 0, 1, 1], [], []>} : vector<8x7xf32>, vector<7x256xf32>, vector<8x256xf32> -> vector<8x256xf32>
    %cst_8 = arith.constant 0.176776692 : f32
    %7 = vector.broadcast %cst_8 : f32 to vector<8x256xf32>
    %8 = arith.mulf %6, %7 : vector<8x256xf32>
    %c0_9 = arith.constant 0 : index
    %c0_10 = arith.constant 0 : index
    %9 = vector.load %arg5[%c0_9, %c0_10] : memref<7x512xf32, #tpu.memory_space<vmem>>, vector<7x512xf32>
    %cst_11 = arith.constant dense<0.000000e+00> : vector<15x512xf32>
    %10 = tpu.matmul %4, %9, %cst_11 {dimension_numbers = #tpu.dot_dimension_numbers<[1], [0], [0], [1], [0, 0, 1, 1], [], []>} : vector<15x7xf32>, vector<7x512xf32>, vector<15x512xf32> -> vector<15x512xf32>
    %11 = vector.extract_strided_slice %10 {offsets = [0, 0], sizes = [15, 256], strides = [1, 1]} : vector<15x512xf32> to vector<15x256xf32>
    %12 = vector.extract_strided_slice %10 {offsets = [0, 256], sizes = [15, 256], strides = [1, 1]} : vector<15x512xf32> to vector<15x256xf32>
    %13 = tpu.iota {dimensions = array<i32: 0>} : vector<8x15xi32>
    %14 = tpu.iota {dimensions = array<i32: 1>} : vector<8x15xi32>
    %15 = arith.cmpi sge, %14, %13 : vector<8x15xi32>
    %c8_i32 = arith.constant 8 : i32
    %16 = vector.broadcast %c8_i32 : i32 to vector<8x15xi32>
    %17 = arith.addi %13, %16 : vector<8x15xi32>
    %18 = arith.cmpi slt, %14, %17 : vector<8x15xi32>
    %19 = arith.andi %15, %18 : vector<8x15xi1>
    %20 = vector.extract_strided_slice %8 {offsets = [0, 0], sizes = [8, 32], strides = [1, 1]} : vector<8x256xf32> to vector<8x32xf32>
    %21 = vector.extract_strided_slice %11 {offsets = [0, 0], sizes = [15, 32], strides = [1, 1]} : vector<15x256xf32> to vector<15x32xf32>
    %22 = vector.extract_strided_slice %12 {offsets = [0, 0], sizes = [15, 32], strides = [1, 1]} : vector<15x256xf32> to vector<15x32xf32>
    %cst_12 = arith.constant dense<0.000000e+00> : vector<8x15xf32>
    %23 = tpu.matmul %20, %21, %cst_12 {dimension_numbers = #tpu.dot_dimension_numbers<[1], [1], [0], [0], [0, 0, 1, 0], [], []>} : vector<8x32xf32>, vector<15x32xf32>, vector<8x15xf32> -> vector<8x15xf32>
    %cst_13 = arith.constant -1.000000e+30 : f32
    %24 = vector.broadcast %cst_13 : f32 to vector<8x15xf32>
    %25 = arith.select %19, %23, %24 : vector<8x15xi1>, vector<8x15xf32>
    %cst_14 = arith.constant dense<0xFF800000> : vector<8xf32>
    %26 = vector.multi_reduction <maximumf>, %25, %cst_14 [1] : vector<8x15xf32> to vector<8xf32>
    %27 = vector.shape_cast %26 : vector<8xf32> to vector<8x1xf32>
    %28 = vector.broadcast %27 : vector<8x1xf32> to vector<8x15xf32>
    %29 = arith.subf %25, %28 : vector<8x15xf32>
    %30 = math.exp %29 : vector<8x15xf32>
    %cst_15 = arith.constant dense<0.000000e+00> : vector<8xf32>
    %31 = vector.multi_reduction <add>, %30, %cst_15 [1] : vector<8x15xf32> to vector<8xf32>
    %32 = vector.shape_cast %31 : vector<8xf32> to vector<8x1xf32>
    %33 = tpu.reciprocal %32 {approx = true} : vector<8x1xf32> -> vector<8x1xf32>
    %34 = vector.broadcast %33 : vector<8x1xf32> to vector<8x15xf32>
    %35 = arith.mulf %30, %34 : vector<8x15xf32>
    %cst_16 = arith.constant dense<0.000000e+00> : vector<8x32xf32>
    %36 = tpu.matmul %35, %22, %cst_16 {dimension_numbers = #tpu.dot_dimension_numbers<[1], [0], [0], [1], [0, 0, 1, 1], [], []>} : vector<8x15xf32>, vector<15x32xf32>, vector<8x32xf32> -> vector<8x32xf32>
    %37 = vector.extract_strided_slice %8 {offsets = [0, 32], sizes = [8, 32], strides = [1, 1]} : vector<8x256xf32> to vector<8x32xf32>
    %38 = vector.extract_strided_slice %11 {offsets = [0, 32], sizes = [15, 32], strides = [1, 1]} : vector<15x256xf32> to vector<15x32xf32>
    %39 = vector.extract_strided_slice %12 {offsets = [0, 32], sizes = [15, 32], strides = [1, 1]} : vector<15x256xf32> to vector<15x32xf32>
    %cst_17 = arith.constant dense<0.000000e+00> : vector<8x15xf32>
    %40 = tpu.matmul %37, %38, %cst_17 {dimension_numbers = #tpu.dot_dimension_numbers<[1], [1], [0], [0], [0, 0, 1, 0], [], []>} : vector<8x32xf32>, vector<15x32xf32>, vector<8x15xf32> -> vector<8x15xf32>
    %cst_18 = arith.constant -1.000000e+30 : f32
    %41 = vector.broadcast %cst_18 : f32 to vector<8x15xf32>
    %42 = arith.select %19, %40, %41 : vector<8x15xi1>, vector<8x15xf32>
    %cst_19 = arith.constant dense<0xFF800000> : vector<8xf32>
    %43 = vector.multi_reduction <maximumf>, %42, %cst_19 [1] : vector<8x15xf32> to vector<8xf32>
    %44 = vector.shape_cast %43 : vector<8xf32> to vector<8x1xf32>
    %45 = vector.broadcast %44 : vector<8x1xf32> to vector<8x15xf32>
    %46 = arith.subf %42, %45 : vector<8x15xf32>
    %47 = math.exp %46 : vector<8x15xf32>
    %cst_20 = arith.constant dense<0.000000e+00> : vector<8xf32>
    %48 = vector.multi_reduction <add>, %47, %cst_20 [1] : vector<8x15xf32> to vector<8xf32>
    %49 = vector.shape_cast %48 : vector<8xf32> to vector<8x1xf32>
    %50 = tpu.reciprocal %49 {approx = true} : vector<8x1xf32> -> vector<8x1xf32>
    %51 = vector.broadcast %50 : vector<8x1xf32> to vector<8x15xf32>
    %52 = arith.mulf %47, %51 : vector<8x15xf32>
    %cst_21 = arith.constant dense<0.000000e+00> : vector<8x32xf32>
    %53 = tpu.matmul %52, %39, %cst_21 {dimension_numbers = #tpu.dot_dimension_numbers<[1], [0], [0], [1], [0, 0, 1, 1], [], []>} : vector<8x15xf32>, vector<15x32xf32>, vector<8x32xf32> -> vector<8x32xf32>
    %54 = vector.extract_strided_slice %8 {offsets = [0, 64], sizes = [8, 32], strides = [1, 1]} : vector<8x256xf32> to vector<8x32xf32>
    %55 = vector.extract_strided_slice %11 {offsets = [0, 64], sizes = [15, 32], strides = [1, 1]} : vector<15x256xf32> to vector<15x32xf32>
    %56 = vector.extract_strided_slice %12 {offsets = [0, 64], sizes = [15, 32], strides = [1, 1]} : vector<15x256xf32> to vector<15x32xf32>
    %cst_22 = arith.constant dense<0.000000e+00> : vector<8x15xf32>
    %57 = tpu.matmul %54, %55, %cst_22 {dimension_numbers = #tpu.dot_dimension_numbers<[1], [1], [0], [0], [0, 0, 1, 0], [], []>} : vector<8x32xf32>, vector<15x32xf32>, vector<8x15xf32> -> vector<8x15xf32>
    %cst_23 = arith.constant -1.000000e+30 : f32
    %58 = vector.broadcast %cst_23 : f32 to vector<8x15xf32>
    %59 = arith.select %19, %57, %58 : vector<8x15xi1>, vector<8x15xf32>
    %cst_24 = arith.constant dense<0xFF800000> : vector<8xf32>
    %60 = vector.multi_reduction <maximumf>, %59, %cst_24 [1] : vector<8x15xf32> to vector<8xf32>
    %61 = vector.shape_cast %60 : vector<8xf32> to vector<8x1xf32>
    %62 = vector.broadcast %61 : vector<8x1xf32> to vector<8x15xf32>
    %63 = arith.subf %59, %62 : vector<8x15xf32>
    %64 = math.exp %63 : vector<8x15xf32>
    %cst_25 = arith.constant dense<0.000000e+00> : vector<8xf32>
    %65 = vector.multi_reduction <add>, %64, %cst_25 [1] : vector<8x15xf32> to vector<8xf32>
    %66 = vector.shape_cast %65 : vector<8xf32> to vector<8x1xf32>
    %67 = tpu.reciprocal %66 {approx = true} : vector<8x1xf32> -> vector<8x1xf32>
    %68 = vector.broadcast %67 : vector<8x1xf32> to vector<8x15xf32>
    %69 = arith.mulf %64, %68 : vector<8x15xf32>
    %cst_26 = arith.constant dense<0.000000e+00> : vector<8x32xf32>
    %70 = tpu.matmul %69, %56, %cst_26 {dimension_numbers = #tpu.dot_dimension_numbers<[1], [0], [0], [1], [0, 0, 1, 1], [], []>} : vector<8x15xf32>, vector<15x32xf32>, vector<8x32xf32> -> vector<8x32xf32>
    %71 = vector.extract_strided_slice %8 {offsets = [0, 96], sizes = [8, 32], strides = [1, 1]} : vector<8x256xf32> to vector<8x32xf32>
    %72 = vector.extract_strided_slice %11 {offsets = [0, 96], sizes = [15, 32], strides = [1, 1]} : vector<15x256xf32> to vector<15x32xf32>
    %73 = vector.extract_strided_slice %12 {offsets = [0, 96], sizes = [15, 32], strides = [1, 1]} : vector<15x256xf32> to vector<15x32xf32>
    %cst_27 = arith.constant dense<0.000000e+00> : vector<8x15xf32>
    %74 = tpu.matmul %71, %72, %cst_27 {dimension_numbers = #tpu.dot_dimension_numbers<[1], [1], [0], [0], [0, 0, 1, 0], [], []>} : vector<8x32xf32>, vector<15x32xf32>, vector<8x15xf32> -> vector<8x15xf32>
    %cst_28 = arith.constant -1.000000e+30 : f32
    %75 = vector.broadcast %cst_28 : f32 to vector<8x15xf32>
    %76 = arith.select %19, %74, %75 : vector<8x15xi1>, vector<8x15xf32>
    %cst_29 = arith.constant dense<0xFF800000> : vector<8xf32>
    %77 = vector.multi_reduction <maximumf>, %76, %cst_29 [1] : vector<8x15xf32> to vector<8xf32>
    %78 = vector.shape_cast %77 : vector<8xf32> to vector<8x1xf32>
    %79 = vector.broadcast %78 : vector<8x1xf32> to vector<8x15xf32>
    %80 = arith.subf %76, %79 : vector<8x15xf32>
    %81 = math.exp %80 : vector<8x15xf32>
    %cst_30 = arith.constant dense<0.000000e+00> : vector<8xf32>
    %82 = vector.multi_reduction <add>, %81, %cst_30 [1] : vector<8x15xf32> to vector<8xf32>
    %83 = vector.shape_cast %82 : vector<8xf32> to vector<8x1xf32>
    %84 = tpu.reciprocal %83 {approx = true} : vector<8x1xf32> -> vector<8x1xf32>
    %85 = vector.broadcast %84 : vector<8x1xf32> to vector<8x15xf32>
    %86 = arith.mulf %81, %85 : vector<8x15xf32>
    %cst_31 = arith.constant dense<0.000000e+00> : vector<8x32xf32>
    %87 = tpu.matmul %86, %73, %cst_31 {dimension_numbers = #tpu.dot_dimension_numbers<[1], [0], [0], [1], [0, 0, 1, 1], [], []>} : vector<8x15xf32>, vector<15x32xf32>, vector<8x32xf32> -> vector<8x32xf32>
    %88 = vector.extract_strided_slice %8 {offsets = [0, 128], sizes = [8, 32], strides = [1, 1]} : vector<8x256xf32> to vector<8x32xf32>
    %89 = vector.extract_strided_slice %11 {offsets = [0, 128], sizes = [15, 32], strides = [1, 1]} : vector<15x256xf32> to vector<15x32xf32>
    %90 = vector.extract_strided_slice %12 {offsets = [0, 128], sizes = [15, 32], strides = [1, 1]} : vector<15x256xf32> to vector<15x32xf32>
    %cst_32 = arith.constant dense<0.000000e+00> : vector<8x15xf32>
    %91 = tpu.matmul %88, %89, %cst_32 {dimension_numbers = #tpu.dot_dimension_numbers<[1], [1], [0], [0], [0, 0, 1, 0], [], []>} : vector<8x32xf32>, vector<15x32xf32>, vector<8x15xf32> -> vector<8x15xf32>
    %cst_33 = arith.constant -1.000000e+30 : f32
    %92 = vector.broadcast %cst_33 : f32 to vector<8x15xf32>
    %93 = arith.select %19, %91, %92 : vector<8x15xi1>, vector<8x15xf32>
    %cst_34 = arith.constant dense<0xFF800000> : vector<8xf32>
    %94 = vector.multi_reduction <maximumf>, %93, %cst_34 [1] : vector<8x15xf32> to vector<8xf32>
    %95 = vector.shape_cast %94 : vector<8xf32> to vector<8x1xf32>
    %96 = vector.broadcast %95 : vector<8x1xf32> to vector<8x15xf32>
    %97 = arith.subf %93, %96 : vector<8x15xf32>
    %98 = math.exp %97 : vector<8x15xf32>
    %cst_35 = arith.constant dense<0.000000e+00> : vector<8xf32>
    %99 = vector.multi_reduction <add>, %98, %cst_35 [1] : vector<8x15xf32> to vector<8xf32>
    %100 = vector.shape_cast %99 : vector<8xf32> to vector<8x1xf32>
    %101 = tpu.reciprocal %100 {approx = true} : vector<8x1xf32> -> vector<8x1xf32>
    %102 = vector.broadcast %101 : vector<8x1xf32> to vector<8x15xf32>
    %103 = arith.mulf %98, %102 : vector<8x15xf32>
    %cst_36 = arith.constant dense<0.000000e+00> : vector<8x32xf32>
    %104 = tpu.matmul %103, %90, %cst_36 {dimension_numbers = #tpu.dot_dimension_numbers<[1], [0], [0], [1], [0, 0, 1, 1], [], []>} : vector<8x15xf32>, vector<15x32xf32>, vector<8x32xf32> -> vector<8x32xf32>
    %105 = vector.extract_strided_slice %8 {offsets = [0, 160], sizes = [8, 32], strides = [1, 1]} : vector<8x256xf32> to vector<8x32xf32>
    %106 = vector.extract_strided_slice %11 {offsets = [0, 160], sizes = [15, 32], strides = [1, 1]} : vector<15x256xf32> to vector<15x32xf32>
    %107 = vector.extract_strided_slice %12 {offsets = [0, 160], sizes = [15, 32], strides = [1, 1]} : vector<15x256xf32> to vector<15x32xf32>
    %cst_37 = arith.constant dense<0.000000e+00> : vector<8x15xf32>
    %108 = tpu.matmul %105, %106, %cst_37 {dimension_numbers = #tpu.dot_dimension_numbers<[1], [1], [0], [0], [0, 0, 1, 0], [], []>} : vector<8x32xf32>, vector<15x32xf32>, vector<8x15xf32> -> vector<8x15xf32>
    %cst_38 = arith.constant -1.000000e+30 : f32
    %109 = vector.broadcast %cst_38 : f32 to vector<8x15xf32>
    %110 = arith.select %19, %108, %109 : vector<8x15xi1>, vector<8x15xf32>
    %cst_39 = arith.constant dense<0xFF800000> : vector<8xf32>
    %111 = vector.multi_reduction <maximumf>, %110, %cst_39 [1] : vector<8x15xf32> to vector<8xf32>
    %112 = vector.shape_cast %111 : vector<8xf32> to vector<8x1xf32>
    %113 = vector.broadcast %112 : vector<8x1xf32> to vector<8x15xf32>
    %114 = arith.subf %110, %113 : vector<8x15xf32>
    %115 = math.exp %114 : vector<8x15xf32>
    %cst_40 = arith.constant dense<0.000000e+00> : vector<8xf32>
    %116 = vector.multi_reduction <add>, %115, %cst_40 [1] : vector<8x15xf32> to vector<8xf32>
    %117 = vector.shape_cast %116 : vector<8xf32> to vector<8x1xf32>
    %118 = tpu.reciprocal %117 {approx = true} : vector<8x1xf32> -> vector<8x1xf32>
    %119 = vector.broadcast %118 : vector<8x1xf32> to vector<8x15xf32>
    %120 = arith.mulf %115, %119 : vector<8x15xf32>
    %cst_41 = arith.constant dense<0.000000e+00> : vector<8x32xf32>
    %121 = tpu.matmul %120, %107, %cst_41 {dimension_numbers = #tpu.dot_dimension_numbers<[1], [0], [0], [1], [0, 0, 1, 1], [], []>} : vector<8x15xf32>, vector<15x32xf32>, vector<8x32xf32> -> vector<8x32xf32>
    %122 = vector.extract_strided_slice %8 {offsets = [0, 192], sizes = [8, 32], strides = [1, 1]} : vector<8x256xf32> to vector<8x32xf32>
    %123 = vector.extract_strided_slice %11 {offsets = [0, 192], sizes = [15, 32], strides = [1, 1]} : vector<15x256xf32> to vector<15x32xf32>
    %124 = vector.extract_strided_slice %12 {offsets = [0, 192], sizes = [15, 32], strides = [1, 1]} : vector<15x256xf32> to vector<15x32xf32>
    %cst_42 = arith.constant dense<0.000000e+00> : vector<8x15xf32>
    %125 = tpu.matmul %122, %123, %cst_42 {dimension_numbers = #tpu.dot_dimension_numbers<[1], [1], [0], [0], [0, 0, 1, 0], [], []>} : vector<8x32xf32>, vector<15x32xf32>, vector<8x15xf32> -> vector<8x15xf32>
    %cst_43 = arith.constant -1.000000e+30 : f32
    %126 = vector.broadcast %cst_43 : f32 to vector<8x15xf32>
    %127 = arith.select %19, %125, %126 : vector<8x15xi1>, vector<8x15xf32>
    %cst_44 = arith.constant dense<0xFF800000> : vector<8xf32>
    %128 = vector.multi_reduction <maximumf>, %127, %cst_44 [1] : vector<8x15xf32> to vector<8xf32>
    %129 = vector.shape_cast %128 : vector<8xf32> to vector<8x1xf32>
    %130 = vector.broadcast %129 : vector<8x1xf32> to vector<8x15xf32>
    %131 = arith.subf %127, %130 : vector<8x15xf32>
    %132 = math.exp %131 : vector<8x15xf32>
    %cst_45 = arith.constant dense<0.000000e+00> : vector<8xf32>
    %133 = vector.multi_reduction <add>, %132, %cst_45 [1] : vector<8x15xf32> to vector<8xf32>
    %134 = vector.shape_cast %133 : vector<8xf32> to vector<8x1xf32>
    %135 = tpu.reciprocal %134 {approx = true} : vector<8x1xf32> -> vector<8x1xf32>
    %136 = vector.broadcast %135 : vector<8x1xf32> to vector<8x15xf32>
    %137 = arith.mulf %132, %136 : vector<8x15xf32>
    %cst_46 = arith.constant dense<0.000000e+00> : vector<8x32xf32>
    %138 = tpu.matmul %137, %124, %cst_46 {dimension_numbers = #tpu.dot_dimension_numbers<[1], [0], [0], [1], [0, 0, 1, 1], [], []>} : vector<8x15xf32>, vector<15x32xf32>, vector<8x32xf32> -> vector<8x32xf32>
    %139 = vector.extract_strided_slice %8 {offsets = [0, 224], sizes = [8, 32], strides = [1, 1]} : vector<8x256xf32> to vector<8x32xf32>
    %140 = vector.extract_strided_slice %11 {offsets = [0, 224], sizes = [15, 32], strides = [1, 1]} : vector<15x256xf32> to vector<15x32xf32>
    %141 = vector.extract_strided_slice %12 {offsets = [0, 224], sizes = [15, 32], strides = [1, 1]} : vector<15x256xf32> to vector<15x32xf32>
    %cst_47 = arith.constant dense<0.000000e+00> : vector<8x15xf32>
    %142 = tpu.matmul %139, %140, %cst_47 {dimension_numbers = #tpu.dot_dimension_numbers<[1], [1], [0], [0], [0, 0, 1, 0], [], []>} : vector<8x32xf32>, vector<15x32xf32>, vector<8x15xf32> -> vector<8x15xf32>
    %cst_48 = arith.constant -1.000000e+30 : f32
    %143 = vector.broadcast %cst_48 : f32 to vector<8x15xf32>
    %144 = arith.select %19, %142, %143 : vector<8x15xi1>, vector<8x15xf32>
    %cst_49 = arith.constant dense<0xFF800000> : vector<8xf32>
    %145 = vector.multi_reduction <maximumf>, %144, %cst_49 [1] : vector<8x15xf32> to vector<8xf32>
    %146 = vector.shape_cast %145 : vector<8xf32> to vector<8x1xf32>
    %147 = vector.broadcast %146 : vector<8x1xf32> to vector<8x15xf32>
    %148 = arith.subf %144, %147 : vector<8x15xf32>
    %149 = math.exp %148 : vector<8x15xf32>
    %cst_50 = arith.constant dense<0.000000e+00> : vector<8xf32>
    %150 = vector.multi_reduction <add>, %149, %cst_50 [1] : vector<8x15xf32> to vector<8xf32>
    %151 = vector.shape_cast %150 : vector<8xf32> to vector<8x1xf32>
    %152 = tpu.reciprocal %151 {approx = true} : vector<8x1xf32> -> vector<8x1xf32>
    %153 = vector.broadcast %152 : vector<8x1xf32> to vector<8x15xf32>
    %154 = arith.mulf %149, %153 : vector<8x15xf32>
    %cst_51 = arith.constant dense<0.000000e+00> : vector<8x32xf32>
    %155 = tpu.matmul %154, %141, %cst_51 {dimension_numbers = #tpu.dot_dimension_numbers<[1], [0], [0], [1], [0, 0, 1, 1], [], []>} : vector<8x15xf32>, vector<15x32xf32>, vector<8x32xf32> -> vector<8x32xf32>
    %156 = tpu.concatenate %36, %53, %70, %87, %104, %121, %138, %155 in 1 : vector<8x32xf32>, vector<8x32xf32>, vector<8x32xf32>, vector<8x32xf32>, vector<8x32xf32>, vector<8x32xf32>, vector<8x32xf32>, vector<8x32xf32> -> vector<8x256xf32>
    %c0_52 = arith.constant 0 : index
    %c0_53 = arith.constant 0 : index
    %157 = vector.load %arg6[%c0_52, %c0_53] : memref<256x7xf32, #tpu.memory_space<vmem>>, vector<256x7xf32>
    %cst_54 = arith.constant dense<0.000000e+00> : vector<8x7xf32>
    %158 = tpu.matmul %156, %157, %cst_54 {dimension_numbers = #tpu.dot_dimension_numbers<[1], [0], [0], [1], [0, 0, 1, 1], [], []>} : vector<8x256xf32>, vector<256x7xf32>, vector<8x7xf32> -> vector<8x7xf32>
    %159 = arith.addf %158, %3 : vector<8x7xf32>
    %c0_55 = arith.constant 0 : index
    %c0_56 = arith.constant 0 : index
    %160 = vector.load %arg9[%c0_55, %c0_56] : memref<2x7xf32, #tpu.memory_space<vmem>>, vector<1x7xf32>
    %c0_57 = arith.constant 0 : index
    %c0_58 = arith.constant 0 : index
    %161 = vector.load %arg10[%c0_57, %c0_58] : memref<2x7xf32, #tpu.memory_space<vmem>>, vector<1x7xf32>
    %cst_59 = arith.constant dense<0.000000e+00> : vector<8xf32>
    %162 = vector.multi_reduction <add>, %159, %cst_59 [1] : vector<8x7xf32> to vector<8xf32>
    %163 = vector.shape_cast %162 : vector<8xf32> to vector<8x1xf32>
    %cst_60 = arith.constant 7.000000e+00 : f32
    %164 = vector.broadcast %cst_60 : f32 to vector<8x1xf32>
    %165 = arith.divf %163, %164 : vector<8x1xf32>
    %166 = vector.broadcast %165 : vector<8x1xf32> to vector<8x7xf32>
    %167 = arith.subf %159, %166 : vector<8x7xf32>
    %168 = arith.mulf %167, %167 : vector<8x7xf32>
    %cst_61 = arith.constant dense<0.000000e+00> : vector<8xf32>
    %169 = vector.multi_reduction <add>, %168, %cst_61 [1] : vector<8x7xf32> to vector<8xf32>
    %170 = vector.shape_cast %169 : vector<8xf32> to vector<8x1xf32>
    %cst_62 = arith.constant 7.000000e+00 : f32
    %171 = vector.broadcast %cst_62 : f32 to vector<8x1xf32>
    %172 = arith.divf %170, %171 : vector<8x1xf32>
    %cst_63 = arith.constant 9.99999974E-6 : f32
    %173 = vector.broadcast %cst_63 : f32 to vector<8x1xf32>
    %174 = arith.addf %172, %173 : vector<8x1xf32>
    %175 = math.rsqrt %174 : vector<8x1xf32>
    %176 = vector.broadcast %175 : vector<8x1xf32> to vector<8x7xf32>
    %177 = arith.mulf %167, %176 : vector<8x7xf32>
    %178 = vector.broadcast %160 : vector<1x7xf32> to vector<8x7xf32>
    %179 = arith.mulf %177, %178 : vector<8x7xf32>
    %180 = vector.broadcast %161 : vector<1x7xf32> to vector<8x7xf32>
    %181 = arith.addf %179, %180 : vector<8x7xf32>
    %c0_64 = arith.constant 0 : index
    %c0_65 = arith.constant 0 : index
    %182 = vector.load %arg7[%c0_64, %c0_65] : memref<7x32xf32, #tpu.memory_space<vmem>>, vector<7x32xf32>
    %cst_66 = arith.constant dense<0.000000e+00> : vector<8x32xf32>
    %183 = tpu.matmul %181, %182, %cst_66 {dimension_numbers = #tpu.dot_dimension_numbers<[1], [0], [0], [1], [0, 0, 1, 1], [], []>} : vector<8x7xf32>, vector<7x32xf32>, vector<8x32xf32> -> vector<8x32xf32>
    %cst_67 = arith.constant 0.000000e+00 : f32
    %184 = vector.broadcast %cst_67 : f32 to vector<8x32xf32>
    %185 = arith.maximumf %183, %184 : vector<8x32xf32>
    %c0_68 = arith.constant 0 : index
    %c0_69 = arith.constant 0 : index
    %186 = vector.load %arg8[%c0_68, %c0_69] : memref<32x7xf32, #tpu.memory_space<vmem>>, vector<32x7xf32>
    %cst_70 = arith.constant dense<0.000000e+00> : vector<8x7xf32>
    %187 = tpu.matmul %185, %186, %cst_70 {dimension_numbers = #tpu.dot_dimension_numbers<[1], [0], [0], [1], [0, 0, 1, 1], [], []>} : vector<8x32xf32>, vector<32x7xf32>, vector<8x7xf32> -> vector<8x7xf32>
    %188 = arith.addf %187, %181 : vector<8x7xf32>
    %c1 = arith.constant 1 : index
    %c0_71 = arith.constant 0 : index
    %189 = vector.load %arg9[%c1, %c0_71] : memref<2x7xf32, #tpu.memory_space<vmem>>, vector<1x7xf32>
    %c1_72 = arith.constant 1 : index
    %c0_73 = arith.constant 0 : index
    %190 = vector.load %arg10[%c1_72, %c0_73] : memref<2x7xf32, #tpu.memory_space<vmem>>, vector<1x7xf32>
    %cst_74 = arith.constant dense<0.000000e+00> : vector<8xf32>
    %191 = vector.multi_reduction <add>, %188, %cst_74 [1] : vector<8x7xf32> to vector<8xf32>
    %192 = vector.shape_cast %191 : vector<8xf32> to vector<8x1xf32>
    %cst_75 = arith.constant 7.000000e+00 : f32
    %193 = vector.broadcast %cst_75 : f32 to vector<8x1xf32>
    %194 = arith.divf %192, %193 : vector<8x1xf32>
    %195 = vector.broadcast %194 : vector<8x1xf32> to vector<8x7xf32>
    %196 = arith.subf %188, %195 : vector<8x7xf32>
    %197 = arith.mulf %196, %196 : vector<8x7xf32>
    %cst_76 = arith.constant dense<0.000000e+00> : vector<8xf32>
    %198 = vector.multi_reduction <add>, %197, %cst_76 [1] : vector<8x7xf32> to vector<8xf32>
    %199 = vector.shape_cast %198 : vector<8xf32> to vector<8x1xf32>
    %cst_77 = arith.constant 7.000000e+00 : f32
    %200 = vector.broadcast %cst_77 : f32 to vector<8x1xf32>
    %201 = arith.divf %199, %200 : vector<8x1xf32>
    %cst_78 = arith.constant 9.99999974E-6 : f32
    %202 = vector.broadcast %cst_78 : f32 to vector<8x1xf32>
    %203 = arith.addf %201, %202 : vector<8x1xf32>
    %204 = math.rsqrt %203 : vector<8x1xf32>
    %205 = vector.broadcast %204 : vector<8x1xf32> to vector<8x7xf32>
    %206 = arith.mulf %196, %205 : vector<8x7xf32>
    %207 = vector.broadcast %189 : vector<1x7xf32> to vector<8x7xf32>
    %208 = arith.mulf %206, %207 : vector<8x7xf32>
    %209 = vector.broadcast %190 : vector<1x7xf32> to vector<8x7xf32>
    %210 = arith.addf %208, %209 : vector<8x7xf32>
    %c0_79 = arith.constant 0 : index
    %c0_80 = arith.constant 0 : index
    %211 = vector.load %arg11[%c0_79, %c0_80] : memref<8x7xf32, #tpu.memory_space<vmem>>, vector<8x7xf32>
    tpu.vector_store %arg11[%c0_79, %c0_80], %210 {strides = array<i32>} : memref<8x7xf32, #tpu.memory_space<vmem>>, vector<8x7xf32>,
    return
  }
  func.func @transform_0(%arg0: i32) -> (i32, i32) {
    %c0_i32 = arith.constant 0 : i32
    %c0_i32_0 = arith.constant 0 : i32
    %c0_i32_1 = arith.constant 0 : i32
    return %c0_i32, %c0_i32_0 : i32, i32
  }
  func.func @transform_1(%arg0: i32) -> (i32, i32) {
    %c0_i32 = arith.constant 0 : i32
    %c0_i32_0 = arith.constant 0 : i32
    %c0_i32_1 = arith.constant 0 : i32
    return %c0_i32, %c0_i32_0 : i32, i32
  }
  func.func @transform_2(%arg0: i32) -> (i32, i32) {
    %c0_i32 = arith.constant 0 : i32
    %c0_i32_0 = arith.constant 0 : i32
    %c0_i32_1 = arith.constant 0 : i32
    return %c0_i32, %c0_i32_0 : i32, i32
  }
  func.func @transform_3(%arg0: i32) -> (i32, i32) {
    %c0_i32 = arith.constant 0 : i32
    %c0_i32_0 = arith.constant 0 : i32
    %c0_i32_1 = arith.constant 0 : i32
    return %c0_i32, %c0_i32_0 : i32, i32
  }
  func.func @transform_4(%arg0: i32) -> (i32, i32) {
    %c0_i32 = arith.constant 0 : i32
    %c0_i32_0 = arith.constant 0 : i32
    %c0_i32_1 = arith.constant 0 : i32
    return %c0_i32, %c0_i32_0 : i32, i32
  }
  func.func @transform_5(%arg0: i32) -> (i32, i32) {
    %c0_i32 = arith.constant 0 : i32
    %c0_i32_0 = arith.constant 0 : i32
    %c0_i32_1 = arith.constant 0 : i32
    return %c0_i32, %c0_i32_0 : i32, i32
  }
  func.func @transform_6(%arg0: i32) -> (i32, i32) {
    %c0_i32 = arith.constant 0 : i32
    %c0_i32_0 = arith.constant 0 : i32
    %c0_i32_1 = arith.constant 0 : i32
    return %c0_i32, %c0_i32_0 : i32, i32
  }
  func.func @transform_7(%arg0: i32) -> (i32, i32) {
    %c0_i32 = arith.constant 0 : i32
    %c0_i32_0 = arith.constant 0 : i32
    %c0_i32_1 = arith.constant 0 : i32
    return %c0_i32, %c0_i32_0 : i32, i32
  }
  func.func @transform_8(%arg0: i32) -> (i32, i32) {
    %c0_i32 = arith.constant 0 : i32
    %c0_i32_0 = arith.constant 0 : i32
    %c0_i32_1 = arith.constant 0 : i32
    return %c0_i32, %c0_i32_0 : i32, i32
  }
  func.func @transform_9(%arg0: i32) -> (i32, i32) {
    %c0_i32 = arith.constant 0 : i32
    %c0_i32_0 = arith.constant 0 : i32
    %c0_i32_1 = arith.constant 0 : i32
    return %c0_i32, %c0_i32_0 : i32, i32
  }
  func.func @transform_10(%arg0: i32) -> (i32, i32) {
    %c0_i32 = arith.constant 0 : i32
    %c0_i32_0 = arith.constant 0 : i32
    %c0_i32_1 = arith.constant 0 : i32
    return %c0_i32, %c0_i32_0 : i32, i32
  }
}

</mosaic_0001>

<llo_original>
// kernel: tpu_custom_call.1
$region0: #{tpu_custom_call.1}
  #allocation0 [shape = 'u32[]', space=smem, size = 0x4, offset = 0x4, fixed_abs, tag = 'smem constant byte address 0x4 - core index']
  #allocation1 [shape = 'u32[144,128]{1,0:T(1,128)}', space=vmem, size = 0x12000, scoped, tag = 'internal scratch']
  %s0 = inlined_call_operand.vmem [shape: bf16[8,256], index: 0, kind: input, shape index: {}]
  %s1 = inlined_call_operand.vmem [shape: bf16[256,7], index: 1, kind: input, shape index: {}]
  %s2 = inlined_call_operand.vmem [shape: f32[15,7], index: 2, kind: input, shape index: {}]
  %s3 = inlined_call_operand.vmem [shape: f32[7,256], index: 3, kind: input, shape index: {}]
  %s4 = inlined_call_operand.vmem [shape: f32[7,512], index: 4, kind: input, shape index: {}]
  %s5 = inlined_call_operand.vmem [shape: f32[256,7], index: 5, kind: input, shape index: {}]
  %s6 = inlined_call_operand.vmem [shape: f32[7,32], index: 6, kind: input, shape index: {}]
  %s7 = inlined_call_operand.vmem [shape: f32[32,7], index: 7, kind: input, shape index: {}]
  %s8 = inlined_call_operand.vmem [shape: f32[2,7], index: 8, kind: input, shape index: {}]
  %s9 = inlined_call_operand.vmem [shape: f32[2,7], index: 9, kind: input, shape index: {}]
  %s10 = inlined_call_operand.hbm [shape: f32[8,7], index: 10, kind: output, shape index: {}]
  %s11 = sld [smem:[#allocation0]]
  $region50: #{tpu_custom_call.1} parent=0
    _
  %s13 = ssub.s32 1, %s11
  %s14 = scalar_select 0, %s13, %s11
  $region1: #{tpu_custom_call.1} parent=0
    #allocation2 [shape = 'u8[4096]{0}', space=vmem, size = 0x1000, scoped, tag = 'output window, operand 0, single buffered']
    #allocation3 [shape = 's32[1]{0}', space=sflag, size = 0x4, scoped, tag = 'scoped memory for tpu_custom_call.1']
    %15 = vsyncpa [#allocation3], 0
    // Predicated region
    $region2: #{tpu_custom_call.1} parent=1 // pred_check
      _
    $region3: #{tpu_custom_call.1} parent=1 // pred_check_branch
      %17 = sbr.rel (0) target = $region5
    $region4: #{tpu_custom_call.1} parent=1 // pred_region
      _
    $region5: #{tpu_custom_call.1} parent=1 // pred_fallthru
      _
    // Predicated region
    $region6: #{tpu_custom_call.1} parent=1 // pred_check
      _
    $region7: #{tpu_custom_call.1} parent=1 // pred_check_branch
      %19 = sbr.rel (0) target = $region9
    $region8: #{tpu_custom_call.1} parent=1 // pred_region
      _
    $region9: #{tpu_custom_call.1} parent=1 // pred_fallthru
      _
    // Predicated region
    $region10: #{tpu_custom_call.1} parent=1 // pred_check
      _
    $region11: #{tpu_custom_call.1} parent=1 // pred_check_branch
      %21 = sbr.rel (0) target = $region13
    $region12: #{tpu_custom_call.1} parent=1 // pred_region
      _
    $region13: #{tpu_custom_call.1} parent=1 // pred_fallthru
      _
    // Predicated region
    $region14: #{tpu_custom_call.1} parent=1 // pred_check
      _
    $region15: #{tpu_custom_call.1} parent=1 // pred_check_branch
      %23 = sbr.rel (0) target = $region17
    $region16: #{tpu_custom_call.1} parent=1 // pred_region
      _
    $region17: #{tpu_custom_call.1} parent=1 // pred_fallthru
      _
    // Predicated region
    $region18: #{tpu_custom_call.1} parent=1 // pred_check
      _
    $region19: #{tpu_custom_call.1} parent=1 // pred_check_branch
      %25 = sbr.rel (0) target = $region21
    $region20: #{tpu_custom_call.1} parent=1 // pred_region
      _
    $region21: #{tpu_custom_call.1} parent=1 // pred_fallthru
      _
    // Predicated region
    $region22: #{tpu_custom_call.1} parent=1 // pred_check
      _
    $region23: #{tpu_custom_call.1} parent=1 // pred_check_branch
      %27 = sbr.rel (0) target = $region25
    $region24: #{tpu_custom_call.1} parent=1 // pred_region
      _
    $region25: #{tpu_custom_call.1} parent=1 // pred_fallthru
      _
    // Predicated region
    $region26: #{tpu_custom_call.1} parent=1 // pred_check
      _
    $region27: #{tpu_custom_call.1} parent=1 // pred_check_branch
      %29 = sbr.rel (0) target = $region29
    $region28: #{tpu_custom_call.1} parent=1 // pred_region
      _
    $region29: #{tpu_custom_call.1} parent=1 // pred_fallthru
      _
    // Predicated region
    $region30: #{tpu_custom_call.1} parent=1 // pred_check
      _
    $region31: #{tpu_custom_call.1} parent=1 // pred_check_branch
      %31 = sbr.rel (0) target = $region33
    $region32: #{tpu_custom_call.1} parent=1 // pred_region
      _
    $region33: #{tpu_custom_call.1} parent=1 // pred_fallthru
      _
    // Predicated region
    $region34: #{tpu_custom_call.1} parent=1 // pred_check
      _
    $region35: #{tpu_custom_call.1} parent=1 // pred_check_branch
      %33 = sbr.rel (0) target = $region37
    $region36: #{tpu_custom_call.1} parent=1 // pred_region
      _
    $region37: #{tpu_custom_call.1} parent=1 // pred_fallthru
      _
    // Predicated region
    $region38: #{tpu_custom_call.1} parent=1 // pred_check
      _
    $region39: #{tpu_custom_call.1} parent=1 // pred_check_branch
      %35 = sbr.rel (0) target = $region41
    $region40: #{tpu_custom_call.1} parent=1 // pred_region
      _
    $region41: #{tpu_custom_call.1} parent=1 // pred_fallthru
      _
    %v37 = vld [vmem:[%s0] sm:$0xff]
    %v38 = vld [vmem:[%s1] sm:$0xf]
    %v39 = vld [vmem:[%s1 + $0x4] sm:$0xf]
    %v40 = vld [vmem:[%s1 + $0x8] sm:$0xf]
    %v41 = vld [vmem:[%s1 + $0xc] sm:$0xf]
    %v42 = vld [vmem:[%s1 + $0x10] sm:$0xf]
    %v43 = vld [vmem:[%s1 + $0x14] sm:$0xf]
    %v44 = vld [vmem:[%s1 + $0x18] sm:$0xf]
    %v45 = vld [vmem:[%s1 + $0x1c] sm:$0xf]
    %v46 = vld [vmem:[%s1 + $0x20] sm:$0xf]
    %v47 = vld [vmem:[%s1 + $0x24] sm:$0xf]
    %v48 = vld [vmem:[%s1 + $0x28] sm:$0xf]
    %v49 = vld [vmem:[%s1 + $0x2c] sm:$0xf]
    %v50 = vld [vmem:[%s1 + $0x30] sm:$0xf]
    %v51 = vld [vmem:[%s1 + $0x34] sm:$0xf]
    %v52 = vld [vmem:[%s1 + $0x38] sm:$0xf]
    %v53 = vld [vmem:[%s1 + $0x3c] sm:$0xf]
    %v54 = vld [vmem:[%s1 + $0x40] sm:$0xf]
    %v55 = vld [vmem:[%s1 + $0x44] sm:$0xf]
    %v56 = vld [vmem:[%s1 + $0x48] sm:$0xf]
    %v57 = vld [vmem:[%s1 + $0x4c] sm:$0xf]
    %v58 = vld [vmem:[%s1 + $0x50] sm:$0xf]
    %v59 = vld [vmem:[%s1 + $0x54] sm:$0xf]
    %v60 = vld [vmem:[%s1 + $0x58] sm:$0xf]
    %v61 = vld [vmem:[%s1 + $0x5c] sm:$0xf]
    %v62 = vld [vmem:[%s1 + $0x60] sm:$0xf]
    %v63 = vld [vmem:[%s1 + $0x64] sm:$0xf]
    %v64 = vld [vmem:[%s1 + $0x68] sm:$0xf]
    %v65 = vld [vmem:[%s1 + $0x6c] sm:$0xf]
    %v66 = vld [vmem:[%s1 + $0x70] sm:$0xf]
    %v67 = vld [vmem:[%s1 + $0x74] sm:$0xf]
    %v68 = vld [vmem:[%s1 + $0x78] sm:$0xf]
    %v69 = vld [vmem:[%s1 + $0x7c] sm:$0xf]
    %v71 = vunpack.c.l.b16 %v37
    %v72 = vunpack.c.h.b16 %v37
    %v73 = vpack.c.b16 %v71, %v71
    %v74 = vpack.c.b16 %v72, %v72
    %v109 = vunpack.c.l.b16 %v38
    %v110 = vunpack.c.l.b16 %v39
    %v111 = vunpack.c.l.b16 %v40
    %v112 = vunpack.c.l.b16 %v41
    %v113 = vunpack.c.l.b16 %v42
    %v114 = vunpack.c.l.b16 %v43
    %v115 = vunpack.c.l.b16 %v44
    %v116 = vunpack.c.l.b16 %v45
    %v117 = vunpack.c.l.b16 %v46
    %v118 = vunpack.c.l.b16 %v47
    %v119 = vunpack.c.l.b16 %v48
    %v120 = vunpack.c.l.b16 %v49
    %v121 = vunpack.c.l.b16 %v50
    %v122 = vunpack.c.l.b16 %v51
    %v123 = vunpack.c.l.b16 %v52
    %v124 = vunpack.c.l.b16 %v53
    %v125 = vunpack.c.l.b16 %v54
    %v126 = vunpack.c.l.b16 %v55
    %v127 = vunpack.c.l.b16 %v56
    %v128 = vunpack.c.l.b16 %v57
    %v129 = vunpack.c.l.b16 %v58
    %v130 = vunpack.c.l.b16 %v59
    %v131 = vunpack.c.l.b16 %v60
    %v132 = vunpack.c.l.b16 %v61
    %v133 = vunpack.c.l.b16 %v62
    %v134 = vunpack.c.l.b16 %v63
    %v135 = vunpack.c.l.b16 %v64
    %v136 = vunpack.c.l.b16 %v65
    %v137 = vunpack.c.l.b16 %v66
    %v138 = vunpack.c.l.b16 %v67
    %v139 = vunpack.c.l.b16 %v68
    %v140 = vunpack.c.l.b16 %v69
    %v141 = vpack.c.b16 %v110, %v109
    %v142 = vpack.c.b16 %v112, %v111
    %v143 = vpack.c.b16 %v114, %v113
    %v144 = vpack.c.b16 %v116, %v115
    %v145 = vpack.c.b16 %v118, %v117
    %v146 = vpack.c.b16 %v120, %v119
    %v147 = vpack.c.b16 %v122, %v121
    %v148 = vpack.c.b16 %v124, %v123
    %v149 = vpack.c.b16 %v126, %v125
    %v150 = vpack.c.b16 %v128, %v127
    %v151 = vpack.c.b16 %v130, %v129
    %v152 = vpack.c.b16 %v132, %v131
    %v153 = vpack.c.b16 %v134, %v133
    %v154 = vpack.c.b16 %v136, %v135
    %v155 = vpack.c.b16 %v138, %v137
    %v156 = vpack.c.b16 %v140, %v139
    %173 = vmatprep.subr.bf16.mxu0 0
    %174 = vmatpush1.bf16.msra.mxu0 %v141
    %175 = vmatprep.subr.bf16.mxu0 0
    %176 = vmatpush1.bf16.msra.mxu0 %v142
    %177 = vmatprep.subr.bf16.mxu0 0
    %178 = vmatpush1.bf16.msra.mxu0 %v143
    %179 = vmatprep.subr.bf16.mxu0 0
    %180 = vmatpush1.bf16.msra.mxu0 %v144
    %181 = vmatprep.subr.bf16.mxu0 0
    %182 = vmatpush1.bf16.msra.mxu0 %v145
    %183 = vmatprep.subr.bf16.mxu0 0
    %184 = vmatpush1.bf16.msra.mxu0 %v146
    %185 = vmatprep.subr.bf16.mxu0 0
    %186 = vmatpush1.bf16.msra.mxu0 %v147
    %187 = vmatprep.subr.bf16.mxu0 0
    %188 = vmatpush1.bf16.msra.mxu0 %v148
    %189 = vmatprep.subr.bf16.mxu0 0
    %190 = vmatpush1.bf16.msra.mxu0 %v149
    %191 = vmatprep.subr.bf16.mxu0 0
    %192 = vmatpush1.bf16.msra.mxu0 %v150
    %193 = vmatprep.subr.bf16.mxu0 0
    %194 = vmatpush1.bf16.msra.mxu0 %v151
    %195 = vmatprep.subr.bf16.mxu0 0
    %196 = vmatpush1.bf16.msra.mxu0 %v152
    %197 = vmatprep.subr.bf16.mxu0 0
    %198 = vmatpush1.bf16.msra.mxu0 %v153
    %199 = vmatprep.subr.bf16.mxu0 0
    %200 = vmatpush1.bf16.msra.mxu0 %v154
    %201 = vmatprep.subr.bf16.mxu0 0
    %202 = vmatpush1.bf16.msra.mxu0 %v155
    %203 = vmatprep.subr.bf16.mxu0 0
    %204 = vmatpush1.bf16.msra.mxu0 %v156
    %205 = vmatprep.mubr.bf16.mxu0 %v74
    %206 = vmatmul.mubr.bf16.gmra.mrb[0].mxu0 %v73
    %v207 = vpop.f32.mrb[0].mxu0
    %v208 = vadd.f32 0.0, %v207
    %v209 = vpop.f32.mrb[0].mxu0
    %v210 = vpop.f32.mrb[0].mxu0
    %v211 = vpop.f32.mrb[0].mxu0
    %212 = vdwg.mxu0
    %v213 = vtanh.pop %v208
    %v214 = vld [vmem:[%s2] sm:$0xff]
    %v215 = vld [vmem:[%s2 + $0x8] sm:$0x7f]
    %v216 = vld [vmem:[%s3] sm:$0x7f]
    %v217 = vld [vmem:[%s3 + $0x8] sm:$0x7f]
    %vm218 = vcmask 56320
    %v220 = vsel %vm218, %v213, 0
    %vm222 = vcmask 1046528
    %v224 = vsel %vm222, %v216, 0
    %v227 = vsel %vm222, %v217, 0
    %229 = vmatprep.subr.mxu0 %v227
    %230 = vmatpush1.msra.mxu0 %v224
    %231 = vmatprep.subr.mxu0 0.0
    %232 = vmatpush1.msra.mxu0 0.0
    %233 = vmatprep.subr.mxu0 0.0
    %234 = vmatpush1.msra.mxu0 0.0
    %235 = vmatprep.subr.mxu0 0.0
    %236 = vmatpush1.msra.mxu0 0.0
    %237 = vmatprep.subr.mxu0 0.0
    %238 = vmatpush1.msra.mxu0 0.0
    %239 = vmatprep.subr.mxu0 0.0
    %240 = vmatpush1.msra.mxu0 0.0
    %241 = vmatprep.subr.mxu0 0.0
    %242 = vmatpush1.msra.mxu0 0.0
    %243 = vmatprep.subr.mxu0 0.0
    %244 = vmatpush1.msra.mxu0 0.0
    %245 = vmatprep.subr.mxu0 0.0
    %246 = vmatpush1.msra.mxu0 0.0
    %247 = vmatprep.subr.mxu0 0.0
    %248 = vmatpush1.msra.mxu0 0.0
    %249 = vmatprep.subr.mxu0 0.0
    %250 = vmatpush1.msra.mxu0 0.0
    %251 = vmatprep.subr.mxu0 0.0
    %252 = vmatpush1.msra.mxu0 0.0
    %253 = vmatprep.subr.mxu0 0.0
    %254 = vmatpush1.msra.mxu0 0.0
    %255 = vmatprep.subr.mxu0 0.0
    %256 = vmatpush1.msra.mxu0 0.0
    %257 = vmatprep.subr.mxu0 0.0
    %258 = vmatpush1.msra.mxu0 0.0
    %259 = vmatprep.subr.mxu0 0.0
    %260 = vmatpush1.msra.mxu0 0.0
    %261 = vmatprep.subr.mxu0 0.0
    %262 = vmatpush1.msra.mxu0 0.0
    %263 = vmatprep.subr.mxu0 0.0
    %264 = vmatpush1.msra.mxu0 0.0
    %265 = vmatprep.subr.mxu0 0.0
    %266 = vmatpush1.msra.mxu0 0.0
    %267 = vmatprep.subr.mxu0 0.0
    %268 = vmatpush1.msra.mxu0 0.0
    %269 = vmatprep.subr.mxu0 0.0
    %270 = vmatpush1.msra.mxu0 0.0
    %271 = vmatprep.subr.mxu0 0.0
    %272 = vmatpush1.msra.mxu0 0.0
    %273 = vmatprep.subr.mxu0 0.0
    %274 = vmatpush1.msra.mxu0 0.0
    %275 = vmatprep.subr.mxu0 0.0
    %276 = vmatpush1.msra.mxu0 0.0
    %277 = vmatprep.subr.mxu0 0.0
    %278 = vmatpush1.msra.mxu0 0.0
    %279 = vmatprep.subr.mxu0 0.0
    %280 = vmatpush1.msra.mxu0 0.0
    %281 = vmatprep.subr.mxu0 0.0
    %282 = vmatpush1.msra.mxu0 0.0
    %283 = vmatprep.subr.mxu0 0.0
    %284 = vmatpush1.msra.mxu0 0.0
    %285 = vmatprep.subr.mxu0 0.0
    %286 = vmatpush1.msra.mxu0 0.0
    %287 = vmatprep.subr.mxu0 0.0
    %288 = vmatpush1.msra.mxu0 0.0
    %289 = vmatprep.subr.mxu0 0.0
    %290 = vmatpush1.msra.mxu0 0.0
    %291 = vmatprep.subr.mxu0 0.0
    %292 = vmatpush1.msra.mxu0 0.0
    %293 = vmatprep.mubr.f32.mxu0 0.0
    %294 = vmatmul.mubr.f32.gmra.mrb[0].mxu0 %v220
    %v295 = vpop.f32.mrb[0].mxu0
    %v296 = vadd.f32 0.0, %v295
    %v297 = vpop.f32.mrb[0].mxu0
    %v298 = vadd.f32 0.0, %v297
    %299 = vdwg.mxu0
    %v300 = vmul.f32 %v296, 0.17677669
    %v301 = vmul.f32 %v298, 0.17677669
    %v302 = vld [vmem:[%s4] sm:$0x7f]
    %v303 = vld [vmem:[%s4 + $0x8] sm:$0x7f]
    %v304 = vld [vmem:[%s4 + $0x10] sm:$0x7f]
    %v305 = vld [vmem:[%s4 + $0x18] sm:$0x7f]
    %v307 = vsel %vm218, %v214, 0
    %v310 = vsel %vm218, %v215, 0
    %v313 = vsel %vm222, %v302, 0
    %v316 = vsel %vm222, %v303, 0
    %v319 = vsel %vm222, %v304, 0
    %v322 = vsel %vm222, %v305, 0
    %324 = vmatprep.subr.mxu0 %v316
    %325 = vmatpush1.msra.mxu0 %v313
    %326 = vmatprep.subr.mxu0 0.0
    %327 = vmatpush1.msra.mxu0 0.0
    %328 = vmatprep.subr.mxu0 0.0
    %329 = vmatpush1.msra.mxu0 0.0
    %330 = vmatprep.subr.mxu0 0.0
    %331 = vmatpush1.msra.mxu0 0.0
    %332 = vmatprep.subr.mxu0 0.0
    %333 = vmatpush1.msra.mxu0 0.0
    %334 = vmatprep.subr.mxu0 0.0
    %335 = vmatpush1.msra.mxu0 0.0
    %336 = vmatprep.subr.mxu0 0.0
    %337 = vmatpush1.msra.mxu0 0.0
    %338 = vmatprep.subr.mxu0 0.0
    %339 = vmatpush1.msra.mxu0 0.0
    %340 = vmatprep.subr.mxu0 0.0
    %341 = vmatpush1.msra.mxu0 0.0
    %342 = vmatprep.subr.mxu0 0.0
    %343 = vmatpush1.msra.mxu0 0.0
    %344 = vmatprep.subr.mxu0 0.0
    %345 = vmatpush1.msra.mxu0 0.0
    %346 = vmatprep.subr.mxu0 0.0
    %347 = vmatpush1.msra.mxu0 0.0
    %348 = vmatprep.subr.mxu0 0.0
    %349 = vmatpush1.msra.mxu0 0.0
    %350 = vmatprep.subr.mxu0 0.0
    %351 = vmatpush1.msra.mxu0 0.0
    %352 = vmatprep.subr.mxu0 0.0
    %353 = vmatpush1.msra.mxu0 0.0
    %354 = vmatprep.subr.mxu0 0.0
    %355 = vmatpush1.msra.mxu0 0.0
    %356 = vmatprep.subr.mxu0 0.0
    %357 = vmatpush1.msra.mxu0 0.0
    %358 = vmatprep.subr.mxu0 0.0
    %359 = vmatpush1.msra.mxu0 0.0
    %360 = vmatprep.subr.mxu0 0.0
    %361 = vmatpush1.msra.mxu0 0.0
    %362 = vmatprep.subr.mxu0 0.0
    %363 = vmatpush1.msra.mxu0 0.0
    %364 = vmatprep.subr.mxu0 0.0
    %365 = vmatpush1.msra.mxu0 0.0
    %366 = vmatprep.subr.mxu0 0.0
    %367 = vmatpush1.msra.mxu0 0.0
    %368 = vmatprep.subr.mxu0 0.0
    %369 = vmatpush1.msra.mxu0 0.0
    %370 = vmatprep.subr.mxu0 0.0
    %371 = vmatpush1.msra.mxu0 0.0
    %372 = vmatprep.subr.mxu0 0.0
    %373 = vmatpush1.msra.mxu0 0.0
    %374 = vmatprep.subr.mxu0 0.0
    %375 = vmatpush1.msra.mxu0 0.0
    %376 = vmatprep.subr.mxu0 0.0
    %377 = vmatpush1.msra.mxu0 0.0
    %378 = vmatprep.subr.mxu0 0.0
    %379 = vmatpush1.msra.mxu0 0.0
    %380 = vmatprep.subr.mxu0 0.0
    %381 = vmatpush1.msra.mxu0 0.0
    %382 = vmatprep.subr.mxu0 0.0
    %383 = vmatpush1.msra.mxu0 0.0
    %384 = vmatprep.subr.mxu0 0.0
    %385 = vmatpush1.msra.mxu0 0.0
    %386 = vmatprep.subr.mxu0 0.0
    %387 = vmatpush1.msra.mxu0 0.0
    %388 = vmatprep.mubr.f32.mxu0 0.0
    %389 = vmatmul.mubr.f32.gmra.mrb[0].mxu0 %v307
    %v390 = vpop.f32.mrb[0].mxu0
    %v391 = vadd.f32 0.0, %v390
    %v392 = vpop.f32.mrb[0].mxu0
    %v393 = vadd.f32 0.0, %v392
    %394 = vmatprep.mubr.f32.mxu0 0.0
    %395 = vmatmul.mubr.f32.gmra.mrb[0].mxu0 %v310
    %v396 = vpop.f32.mrb[0].mxu0
    %v397 = vadd.f32 0.0, %v396
    %v398 = vpop.f32.mrb[0].mxu0
    %v399 = vadd.f32 0.0, %v398
    %400 = vdwg.mxu0
    %401 = vmatprep.subr.mxu0 %v322
    %402 = vmatpush1.msra.mxu0 %v319
    %403 = vmatprep.subr.mxu0 0.0
    %404 = vmatpush1.msra.mxu0 0.0
    %405 = vmatprep.subr.mxu0 0.0
    %406 = vmatpush1.msra.mxu0 0.0
    %407 = vmatprep.subr.mxu0 0.0
    %408 = vmatpush1.msra.mxu0 0.0
    %409 = vmatprep.subr.mxu0 0.0
    %410 = vmatpush1.msra.mxu0 0.0
    %411 = vmatprep.subr.mxu0 0.0
    %412 = vmatpush1.msra.mxu0 0.0
    %413 = vmatprep.subr.mxu0 0.0
    %414 = vmatpush1.msra.mxu0 0.0
    %415 = vmatprep.subr.mxu0 0.0
    %416 = vmatpush1.msra.mxu0 0.0
    %417 = vmatprep.subr.mxu0 0.0
    %418 = vmatpush1.msra.mxu0 0.0
    %419 = vmatprep.subr.mxu0 0.0
    %420 = vmatpush1.msra.mxu0 0.0
    %421 = vmatprep.subr.mxu0 0.0
    %422 = vmatpush1.msra.mxu0 0.0
    %423 = vmatprep.subr.mxu0 0.0
    %424 = vmatpush1.msra.mxu0 0.0
    %425 = vmatprep.subr.mxu0 0.0
    %426 = vmatpush1.msra.mxu0 0.0
    %427 = vmatprep.subr.mxu0 0.0
    %428 = vmatpush1.msra.mxu0 0.0
    %429 = vmatprep.subr.mxu0 0.0
    %430 = vmatpush1.msra.mxu0 0.0
    %431 = vmatprep.subr.mxu0 0.0
    %432 = vmatpush1.msra.mxu0 0.0
    %433 = vmatprep.subr.mxu0 0.0
    %434 = vmatpush1.msra.mxu0 0.0
    %435 = vmatprep.subr.mxu0 0.0
    %436 = vmatpush1.msra.mxu0 0.0
    %437 = vmatprep.subr.mxu0 0.0
    %438 = vmatpush1.msra.mxu0 0.0
    %439 = vmatprep.subr.mxu0 0.0
    %440 = vmatpush1.msra.mxu0 0.0
    %441 = vmatprep.subr.mxu0 0.0
    %442 = vmatpush1.msra.mxu0 0.0
    %443 = vmatprep.subr.mxu0 0.0
    %444 = vmatpush1.msra.mxu0 0.0
    %445 = vmatprep.subr.mxu0 0.0
    %446 = vmatpush1.msra.mxu0 0.0
    %447 = vmatprep.subr.mxu0 0.0
    %448 = vmatpush1.msra.mxu0 0.0
    %449 = vmatprep.subr.mxu0 0.0
    %450 = vmatpush1.msra.mxu0 0.0
    %451 = vmatprep.subr.mxu0 0.0
    %452 = vmatpush1.msra.mxu0 0.0
    %453 = vmatprep.subr.mxu0 0.0
    %454 = vmatpush1.msra.mxu0 0.0
    %455 = vmatprep.subr.mxu0 0.0
    %456 = vmatpush1.msra.mxu0 0.0
    %457 = vmatprep.subr.mxu0 0.0
    %458 = vmatpush1.msra.mxu0 0.0
    %459 = vmatprep.subr.mxu0 0.0
    %460 = vmatpush1.msra.mxu0 0.0
    %461 = vmatprep.subr.mxu0 0.0
    %462 = vmatpush1.msra.mxu0 0.0
    %463 = vmatprep.subr.mxu0 0.0
    %464 = vmatpush1.msra.mxu0 0.0
    %465 = vmatprep.mubr.f32.mxu0 0.0
    %466 = vmatmul.mubr.f32.gmra.mrb[0].mxu0 %v307
    %v467 = vpop.f32.mrb[0].mxu0
    %v468 = vadd.f32 0.0, %v467
    %v469 = vpop.f32.mrb[0].mxu0
    %v470 = vadd.f32 0.0, %v469
    %471 = vmatprep.mubr.f32.mxu0 0.0
    %472 = vmatmul.mubr.f32.gmra.mrb[0].mxu0 %v310
    %v473 = vpop.f32.mrb[0].mxu0
    %v474 = vadd.f32 0.0, %v473
    %v475 = vpop.f32.mrb[0].mxu0
    %v476 = vadd.f32 0.0, %v475
    %477 = vdwg.mxu0
    %v478 = vlaneseq
    %v479 = vshrl.u32 %v478, 7
    %v480 = vlaneseq
    %v481 = vand.u32 %v480, 127
    %vm482 = vcmp.ge.s32.totalorder %v481, %v479
    %v483 = vadd.s32 %v479, 8
    %vm484 = vcmp.lt.s32.totalorder %v481, %v483
    %vm485 = vmand %vm482, %vm484
    %vm486 = vcmask 261120
    %v488 = vsel %vm486, %v300, 0
    %v491 = vsel %vm486, %v391, 0
    %v494 = vsel %vm486, %v397, 0
    %496 = vmatprep.subr.mxu0 0.0
    %497 = vmatpush1.xpose.msra.mxu0 %v491
    %498 = vmatprep.subr.mxu0 0.0
    %499 = vmatpush1.xpose.msra.mxu0 %v494
    %500 = vmatprep.subr.mxu0 0.0
    %501 = vmatpush1.xpose.msra.mxu0 0.0
    %502 = vmatprep.subr.mxu0 0.0
    %503 = vmatpush1.xpose.msra.mxu0 0.0
    %504 = vmatprep.subr.mxu0 0.0
    %505 = vmatpush1.xpose.msra.mxu0 0.0
    %506 = vmatprep.subr.mxu0 0.0
    %507 = vmatpush1.xpose.msra.mxu0 0.0
    %508 = vmatprep.subr.mxu0 0.0
    %509 = vmatpush1.xpose.msra.mxu0 0.0
    %510 = vmatprep.subr.mxu0 0.0
    %511 = vmatpush1.xpose.msra.mxu0 0.0
    %512 = vmatprep.subr.mxu0 0.0
    %513 = vmatpush1.xpose.msra.mxu0 0.0
    %514 = vmatprep.subr.mxu0 0.0
    %515 = vmatpush1.xpose.msra.mxu0 0.0
    %516 = vmatprep.subr.mxu0 0.0
    %517 = vmatpush1.xpose.msra.mxu0 0.0
    %518 = vmatprep.subr.mxu0 0.0
    %519 = vmatpush1.xpose.msra.mxu0 0.0
    %520 = vmatprep.subr.mxu0 0.0
    %521 = vmatpush1.xpose.msra.mxu0 0.0
    %522 = vmatprep.subr.mxu0 0.0
    %523 = vmatpush1.xpose.msra.mxu0 0.0
    %524 = vmatprep.subr.mxu0 0.0
    %525 = vmatpush1.xpose.msra.mxu0 0.0
    %526 = vmatprep.subr.mxu0 0.0
    %527 = vmatpush1.xpose.msra.mxu0 0.0
    %528 = vmatprep.subr.mxu0 0.0
    %529 = vmatpush1.xpose.msra.mxu0 0.0
    %530 = vmatprep.subr.mxu0 0.0
    %531 = vmatpush1.xpose.msra.mxu0 0.0
    %532 = vmatprep.subr.mxu0 0.0
    %533 = vmatpush1.xpose.msra.mxu0 0.0
    %534 = vmatprep.subr.mxu0 0.0
    %535 = vmatpush1.xpose.msra.mxu0 0.0
    %536 = vmatprep.subr.mxu0 0.0
    %537 = vmatpush1.xpose.msra.mxu0 0.0
    %538 = vmatprep.subr.mxu0 0.0
    %539 = vmatpush1.xpose.msra.mxu0 0.0
    %540 = vmatprep.subr.mxu0 0.0
    %541 = vmatpush1.xpose.msra.mxu0 0.0
    %542 = vmatprep.subr.mxu0 0.0
    %543 = vmatpush1.xpose.msra.mxu0 0.0
    %544 = vmatprep.subr.mxu0 0.0
    %545 = vmatpush1.xpose.msra.mxu0 0.0
    %546 = vmatprep.subr.mxu0 0.0
    %547 = vmatpush1.xpose.msra.mxu0 0.0
    %548 = vmatprep.subr.mxu0 0.0
    %549 = vmatpush1.xpose.msra.mxu0 0.0
    %550 = vmatprep.subr.mxu0 0.0
    %551 = vmatpush1.xpose.msra.mxu0 0.0
    %552 = vmatprep.subr.mxu0 0.0
    %553 = vmatpush1.xpose.msra.mxu0 0.0
    %554 = vmatprep.subr.mxu0 0.0
    %555 = vmatpush1.xpose.msra.mxu0 0.0
    %556 = vmatprep.subr.mxu0 0.0
    %557 = vmatpush1.xpose.msra.mxu0 0.0
    %558 = vmatprep.subr.mxu0 0.0
    %559 = vmatpush1.xpose.msra.mxu0 0.0
    %560 = vmatprep.mubr.f32.mxu0 0.0
    %561 = vmatmul.mubr.f32.gmra.mrb[0].mxu0 %v488
    %v562 = vpop.f32.mrb[0].mxu0
    %v563 = vadd.f32 0.0, %v562
    %v564 = vpop.f32.mrb[0].mxu0
    %565 = vdwg.mxu0
    %v566 = vsel %vm485, %v563, -1e+30
    %vm567 = vcmask 121856
    %v568 = vsel %vm567, %v566, -inf
    %569 = vmax.xlane.f32.xlu0 %v568
    %v570 = vpop.xlane.xlu0 %569
    %v571 = vsub.f32 %v566, %v570
    %v572 = vmul.f32 %v571, 1.442695
    %v573 = vpow.pop %v572
    %v574 = vsel %vm567, %v573, 0.0
    %575 = vadd.xlane.f32.xlu0 %v574
    %v576 = vpop.xlane.xlu0 %575
    %v577 = vrcp.pop %v576
    %v578 = vmul.f32 %v573, %v577
    %v580 = vsel %vm567, %v578, 0
    %v583 = vsel %vm222, %v474, 0
    %585 = vmatprep.subr.mxu0 0.0
    %586 = vmatpush1.msra.mxu0 %v468
    %587 = vmatprep.subr.mxu0 0.0
    %588 = vmatpush1.msra.mxu0 %v583
    %589 = vmatprep.subr.mxu0 0.0
    %590 = vmatpush1.msra.mxu0 0.0
    %591 = vmatprep.subr.mxu0 0.0
    %592 = vmatpush1.msra.mxu0 0.0
    %593 = vmatprep.subr.mxu0 0.0
    %594 = vmatpush1.msra.mxu0 0.0
    %595 = vmatprep.subr.mxu0 0.0
    %596 = vmatpush1.msra.mxu0 0.0
    %597 = vmatprep.subr.mxu0 0.0
    %598 = vmatpush1.msra.mxu0 0.0
    %599 = vmatprep.subr.mxu0 0.0
    %600 = vmatpush1.msra.mxu0 0.0
    %601 = vmatprep.subr.mxu0 0.0
    %602 = vmatpush1.msra.mxu0 0.0
    %603 = vmatprep.subr.mxu0 0.0
    %604 = vmatpush1.msra.mxu0 0.0
    %605 = vmatprep.subr.mxu0 0.0
    %606 = vmatpush1.msra.mxu0 0.0
    %607 = vmatprep.subr.mxu0 0.0
    %608 = vmatpush1.msra.mxu0 0.0
    %609 = vmatprep.subr.mxu0 0.0
    %610 = vmatpush1.msra.mxu0 0.0
    %611 = vmatprep.subr.mxu0 0.0
    %612 = vmatpush1.msra.mxu0 0.0
    %613 = vmatprep.subr.mxu0 0.0
    %614 = vmatpush1.msra.mxu0 0.0
    %615 = vmatprep.subr.mxu0 0.0
    %616 = vmatpush1.msra.mxu0 0.0
    %617 = vmatprep.subr.mxu0 0.0
    %618 = vmatpush1.msra.mxu0 0.0
    %619 = vmatprep.subr.mxu0 0.0
    %620 = vmatpush1.msra.mxu0 0.0
    %621 = vmatprep.subr.mxu0 0.0
    %622 = vmatpush1.msra.mxu0 0.0
    %623 = vmatprep.subr.mxu0 0.0
    %624 = vmatpush1.msra.mxu0 0.0
    %625 = vmatprep.subr.mxu0 0.0
    %626 = vmatpush1.msra.mxu0 0.0
    %627 = vmatprep.subr.mxu0 0.0
    %628 = vmatpush1.msra.mxu0 0.0
    %629 = vmatprep.subr.mxu0 0.0
    %630 = vmatpush1.msra.mxu0 0.0
    %631 = vmatprep.subr.mxu0 0.0
    %632 = vmatpush1.msra.mxu0 0.0
    %633 = vmatprep.subr.mxu0 0.0
    %634 = vmatpush1.msra.mxu0 0.0
    %635 = vmatprep.subr.mxu0 0.0
    %636 = vmatpush1.msra.mxu0 0.0
    %637 = vmatprep.subr.mxu0 0.0
    %638 = vmatpush1.msra.mxu0 0.0
    %639 = vmatprep.subr.mxu0 0.0
    %640 = vmatpush1.msra.mxu0 0.0
    %641 = vmatprep.subr.mxu0 0.0
    %642 = vmatpush1.msra.mxu0 0.0
    %643 = vmatprep.subr.mxu0 0.0
    %644 = vmatpush1.msra.mxu0 0.0
    %645 = vmatprep.subr.mxu0 0.0
    %646 = vmatpush1.msra.mxu0 0.0
    %647 = vmatprep.subr.mxu0 0.0
    %648 = vmatpush1.msra.mxu0 0.0
    %649 = vmatprep.mubr.f32.mxu0 0.0
    %650 = vmatmul.mubr.f32.gmra.mrb[0].mxu0 %v580
    %v651 = vpop.f32.mrb[0].mxu0
    %v652 = vadd.f32 0.0, %v651
    %v653 = vpop.f32.mrb[0].mxu0
    %654 = vdwg.mxu0
    %655 = vrot.lane.b32.xlu0 %v300, 96
    %v656 = vpop.permute.xlu0 %655
    %657 = vrot.lane.b32.xlu0 %v391, 96
    %v658 = vpop.permute.xlu0 %657
    %659 = vrot.lane.b32.xlu0 %v397, 96
    %v660 = vpop.permute.xlu0 %659
    %v661 = vsel %vm486, %v656, 0
    %v663 = vsel %vm486, %v658, 0
    %v665 = vsel %vm486, %v660, 0
    %667 = vmatprep.subr.mxu0 0.0
    %668 = vmatpush1.xpose.msra.mxu0 %v663
    %669 = vmatprep.subr.mxu0 0.0
    %670 = vmatpush1.xpose.msra.mxu0 %v665
    %671 = vmatprep.subr.mxu0 0.0
    %672 = vmatpush1.xpose.msra.mxu0 0.0
    %673 = vmatprep.subr.mxu0 0.0
    %674 = vmatpush1.xpose.msra.mxu0 0.0
    %675 = vmatprep.subr.mxu0 0.0
    %676 = vmatpush1.xpose.msra.mxu0 0.0
    %677 = vmatprep.subr.mxu0 0.0
    %678 = vmatpush1.xpose.msra.mxu0 0.0
    %679 = vmatprep.subr.mxu0 0.0
    %680 = vmatpush1.xpose.msra.mxu0 0.0
    %681 = vmatprep.subr.mxu0 0.0
    %682 = vmatpush1.xpose.msra.mxu0 0.0
    %683 = vmatprep.subr.mxu0 0.0
    %684 = vmatpush1.xpose.msra.mxu0 0.0
    %685 = vmatprep.subr.mxu0 0.0
    %686 = vmatpush1.xpose.msra.mxu0 0.0
    %687 = vmatprep.subr.mxu0 0.0
    %688 = vmatpush1.xpose.msra.mxu0 0.0
    %689 = vmatprep.subr.mxu0 0.0
    %690 = vmatpush1.xpose.msra.mxu0 0.0
    %691 = vmatprep.subr.mxu0 0.0
    %692 = vmatpush1.xpose.msra.mxu0 0.0
    %693 = vmatprep.subr.mxu0 0.0
    %694 = vmatpush1.xpose.msra.mxu0 0.0
    %695 = vmatprep.subr.mxu0 0.0
    %696 = vmatpush1.xpose.msra.mxu0 0.0
    %697 = vmatprep.subr.mxu0 0.0
    %698 = vmatpush1.xpose.msra.mxu0 0.0
    %699 = vmatprep.subr.mxu0 0.0
    %700 = vmatpush1.xpose.msra.mxu0 0.0
    %701 = vmatprep.subr.mxu0 0.0
    %702 = vmatpush1.xpose.msra.mxu0 0.0
    %703 = vmatprep.subr.mxu0 0.0
    %704 = vmatpush1.xpose.msra.mxu0 0.0
    %705 = vmatprep.subr.mxu0 0.0
    %706 = vmatpush1.xpose.msra.mxu0 0.0
    %707 = vmatprep.subr.mxu0 0.0
    %708 = vmatpush1.xpose.msra.mxu0 0.0
    %709 = vmatprep.subr.mxu0 0.0
    %710 = vmatpush1.xpose.msra.mxu0 0.0
    %711 = vmatprep.subr.mxu0 0.0
    %712 = vmatpush1.xpose.msra.mxu0 0.0
    %713 = vmatprep.subr.mxu0 0.0
    %714 = vmatpush1.xpose.msra.mxu0 0.0
    %715 = vmatprep.subr.mxu0 0.0
    %716 = vmatpush1.xpose.msra.mxu0 0.0
    %717 = vmatprep.subr.mxu0 0.0
    %718 = vmatpush1.xpose.msra.mxu0 0.0
    %719 = vmatprep.subr.mxu0 0.0
    %720 = vmatpush1.xpose.msra.mxu0 0.0
    %721 = vmatprep.subr.mxu0 0.0
    %722 = vmatpush1.xpose.msra.mxu0 0.0
    %723 = vmatprep.subr.mxu0 0.0
    %724 = vmatpush1.xpose.msra.mxu0 0.0
    %725 = vmatprep.subr.mxu0 0.0
    %726 = vmatpush1.xpose.msra.mxu0 0.0
    %727 = vmatprep.subr.mxu0 0.0
    %728 = vmatpush1.xpose.msra.mxu0 0.0
    %729 = vmatprep.subr.mxu0 0.0
    %730 = vmatpush1.xpose.msra.mxu0 0.0
    %731 = vmatprep.mubr.f32.mxu0 0.0
    %732 = vmatmul.mubr.f32.gmra.mrb[0].mxu0 %v661
    %v733 = vpop.f32.mrb[0].mxu0
    %v734 = vadd.f32 0.0, %v733
    %v735 = vpop.f32.mrb[0].mxu0
    %736 = vdwg.mxu0
    %v737 = vsel %vm485, %v734, -1e+30
    %v738 = vsel %vm567, %v737, -inf
    %739 = vmax.xlane.f32.xlu0 %v738
    %v740 = vpop.xlane.xlu0 %739
    %v741 = vsub.f32 %v737, %v740
    %v742 = vmul.f32 %v741, 1.442695
    %v743 = vpow.pop %v742
    %v744 = vsel %vm567, %v743, 0.0
    %745 = vadd.xlane.f32.xlu0 %v744
    %v746 = vpop.xlane.xlu0 %745
    %v747 = vrcp.pop %v746
    %v748 = vmul.f32 %v743, %v747
    %750 = vrot.lane.b32.xlu0 %v468, 96
    %v751 = vpop.permute.xlu0 %750
    %752 = vrot.lane.b32.xlu0 %v474, 96
    %v753 = vpop.permute.xlu0 %752
    %v756 = vsel %vm567, %v748, 0
    %v758 = vsel %vm222, %v753, 0
    %760 = vmatprep.subr.mxu0 0.0
    %761 = vmatpush1.msra.mxu0 %v751
    %762 = vmatprep.subr.mxu0 0.0
    %763 = vmatpush1.msra.mxu0 %v758
    %764 = vmatprep.subr.mxu0 0.0
    %765 = vmatpush1.msra.mxu0 0.0
    %766 = vmatprep.subr.mxu0 0.0
    %767 = vmatpush1.msra.mxu0 0.0
    %768 = vmatprep.subr.mxu0 0.0
    %769 = vmatpush1.msra.mxu0 0.0
    %770 = vmatprep.subr.mxu0 0.0
    %771 = vmatpush1.msra.mxu0 0.0
    %772 = vmatprep.subr.mxu0 0.0
    %773 = vmatpush1.msra.mxu0 0.0
    %774 = vmatprep.subr.mxu0 0.0
    %775 = vmatpush1.msra.mxu0 0.0
    %776 = vmatprep.subr.mxu0 0.0
    %777 = vmatpush1.msra.mxu0 0.0
    %778 = vmatprep.subr.mxu0 0.0
    %779 = vmatpush1.msra.mxu0 0.0
    %780 = vmatprep.subr.mxu0 0.0
    %781 = vmatpush1.msra.mxu0 0.0
    %782 = vmatprep.subr.mxu0 0.0
    %783 = vmatpush1.msra.mxu0 0.0
    %784 = vmatprep.subr.mxu0 0.0
    %785 = vmatpush1.msra.mxu0 0.0
    %786 = vmatprep.subr.mxu0 0.0
    %787 = vmatpush1.msra.mxu0 0.0
    %788 = vmatprep.subr.mxu0 0.0
    %789 = vmatpush1.msra.mxu0 0.0
    %790 = vmatprep.subr.mxu0 0.0
    %791 = vmatpush1.msra.mxu0 0.0
    %792 = vmatprep.subr.mxu0 0.0
    %793 = vmatpush1.msra.mxu0 0.0
    %794 = vmatprep.subr.mxu0 0.0
    %795 = vmatpush1.msra.mxu0 0.0
    %796 = vmatprep.subr.mxu0 0.0
    %797 = vmatpush1.msra.mxu0 0.0
    %798 = vmatprep.subr.mxu0 0.0
    %799 = vmatpush1.msra.mxu0 0.0
    %800 = vmatprep.subr.mxu0 0.0
    %801 = vmatpush1.msra.mxu0 0.0
    %802 = vmatprep.subr.mxu0 0.0
    %803 = vmatpush1.msra.mxu0 0.0
    %804 = vmatprep.subr.mxu0 0.0
    %805 = vmatpush1.msra.mxu0 0.0
    %806 = vmatprep.subr.mxu0 0.0
    %807 = vmatpush1.msra.mxu0 0.0
    %808 = vmatprep.subr.mxu0 0.0
    %809 = vmatpush1.msra.mxu0 0.0
    %810 = vmatprep.subr.mxu0 0.0
    %811 = vmatpush1.msra.mxu0 0.0
    %812 = vmatprep.subr.mxu0 0.0
    %813 = vmatpush1.msra.mxu0 0.0
    %814 = vmatprep.subr.mxu0 0.0
    %815 = vmatpush1.msra.mxu0 0.0
    %816 = vmatprep.subr.mxu0 0.0
    %817 = vmatpush1.msra.mxu0 0.0
    %818 = vmatprep.subr.mxu0 0.0
    %819 = vmatpush1.msra.mxu0 0.0
    %820 = vmatprep.subr.mxu0 0.0
    %821 = vmatpush1.msra.mxu0 0.0
    %822 = vmatprep.subr.mxu0 0.0
    %823 = vmatpush1.msra.mxu0 0.0
    %824 = vmatprep.mubr.f32.mxu0 0.0
    %825 = vmatmul.mubr.f32.gmra.mrb[0].mxu0 %v756
    %v826 = vpop.f32.mrb[0].mxu0
    %v827 = vadd.f32 0.0, %v826
    %v828 = vpop.f32.mrb[0].mxu0
    %829 = vdwg.mxu0
    %830 = vrot.lane.b32.xlu0 %v300, 64
    %v831 = vpop.permute.xlu0 %830
    %832 = vrot.lane.b32.xlu0 %v391, 64
    %v833 = vpop.permute.xlu0 %832
    %834 = vrot.lane.b32.xlu0 %v397, 64
    %v835 = vpop.permute.xlu0 %834
    %v836 = vsel %vm486, %v831, 0
    %v838 = vsel %vm486, %v833, 0
    %v840 = vsel %vm486, %v835, 0
    %842 = vmatprep.subr.mxu0 0.0
    %843 = vmatpush1.xpose.msra.mxu0 %v838
    %844 = vmatprep.subr.mxu0 0.0
    %845 = vmatpush1.xpose.msra.mxu0 %v840
    %846 = vmatprep.subr.mxu0 0.0
    %847 = vmatpush1.xpose.msra.mxu0 0.0
    %848 = vmatprep.subr.mxu0 0.0
    %849 = vmatpush1.xpose.msra.mxu0 0.0
    %850 = vmatprep.subr.mxu0 0.0
    %851 = vmatpush1.xpose.msra.mxu0 0.0
    %852 = vmatprep.subr.mxu0 0.0
    %853 = vmatpush1.xpose.msra.mxu0 0.0
    %854 = vmatprep.subr.mxu0 0.0
    %855 = vmatpush1.xpose.msra.mxu0 0.0
    %856 = vmatprep.subr.mxu0 0.0
    %857 = vmatpush1.xpose.msra.mxu0 0.0
    %858 = vmatprep.subr.mxu0 0.0
    %859 = vmatpush1.xpose.msra.mxu0 0.0
    %860 = vmatprep.subr.mxu0 0.0
    %861 = vmatpush1.xpose.msra.mxu0 0.0
    %862 = vmatprep.subr.mxu0 0.0
    %863 = vmatpush1.xpose.msra.mxu0 0.0
    %864 = vmatprep.subr.mxu0 0.0
    %865 = vmatpush1.xpose.msra.mxu0 0.0
    %866 = vmatprep.subr.mxu0 0.0
    %867 = vmatpush1.xpose.msra.mxu0 0.0
    %868 = vmatprep.subr.mxu0 0.0
    %869 = vmatpush1.xpose.msra.mxu0 0.0
    %870 = vmatprep.subr.mxu0 0.0
    %871 = vmatpush1.xpose.msra.mxu0 0.0
    %872 = vmatprep.subr.mxu0 0.0
    %873 = vmatpush1.xpose.msra.mxu0 0.0
    %874 = vmatprep.subr.mxu0 0.0
    %875 = vmatpush1.xpose.msra.mxu0 0.0
    %876 = vmatprep.subr.mxu0 0.0
    %877 = vmatpush1.xpose.msra.mxu0 0.0
    %878 = vmatprep.subr.mxu0 0.0
    %879 = vmatpush1.xpose.msra.mxu0 0.0
    %880 = vmatprep.subr.mxu0 0.0
    %881 = vmatpush1.xpose.msra.mxu0 0.0
    %882 = vmatprep.subr.mxu0 0.0
    %883 = vmatpush1.xpose.msra.mxu0 0.0
    %884 = vmatprep.subr.mxu0 0.0
    %885 = vmatpush1.xpose.msra.mxu0 0.0
    %886 = vmatprep.subr.mxu0 0.0
    %887 = vmatpush1.xpose.msra.mxu0 0.0
    %888 = vmatprep.subr.mxu0 0.0
    %889 = vmatpush1.xpose.msra.mxu0 0.0
    %890 = vmatprep.subr.mxu0 0.0
    %891 = vmatpush1.xpose.msra.mxu0 0.0
    %892 = vmatprep.subr.mxu0 0.0
    %893 = vmatpush1.xpose.msra.mxu0 0.0
    %894 = vmatprep.subr.mxu0 0.0
    %895 = vmatpush1.xpose.msra.mxu0 0.0
    %896 = vmatprep.subr.mxu0 0.0
    %897 = vmatpush1.xpose.msra.mxu0 0.0
    %898 = vmatprep.subr.mxu0 0.0
    %899 = vmatpush1.xpose.msra.mxu0 0.0
    %900 = vmatprep.subr.mxu0 0.0
    %901 = vmatpush1.xpose.msra.mxu0 0.0
    %902 = vmatprep.subr.mxu0 0.0
    %903 = vmatpush1.xpose.msra.mxu0 0.0
    %904 = vmatprep.subr.mxu0 0.0
    %905 = vmatpush1.xpose.msra.mxu0 0.0
    %906 = vmatprep.mubr.f32.mxu0 0.0
    %907 = vmatmul.mubr.f32.gmra.mrb[0].mxu0 %v836
    %v908 = vpop.f32.mrb[0].mxu0
    %v909 = vadd.f32 0.0, %v908
    %v910 = vpop.f32.mrb[0].mxu0
    %911 = vdwg.mxu0
    %v912 = vsel %vm485, %v909, -1e+30
    %v913 = vsel %vm567, %v912, -inf
    %914 = vmax.xlane.f32.xlu0 %v913
    %v915 = vpop.xlane.xlu0 %914
    %v916 = vsub.f32 %v912, %v915
    %v917 = vmul.f32 %v916, 1.442695
    %v918 = vpow.pop %v917
    %v919 = vsel %vm567, %v918, 0.0
    %920 = vadd.xlane.f32.xlu0 %v919
    %v921 = vpop.xlane.xlu0 %920
    %v922 = vrcp.pop %v921
    %v923 = vmul.f32 %v918, %v922
    %924 = vrot.lane.b32.xlu0 %v468, 64
    %v925 = vpop.permute.xlu0 %924
    %926 = vrot.lane.b32.xlu0 %v474, 64
    %v927 = vpop.permute.xlu0 %926
    %v930 = vsel %vm567, %v923, 0
    %v932 = vsel %vm222, %v927, 0
    %934 = vmatprep.subr.mxu0 0.0
    %935 = vmatpush1.msra.mxu0 %v925
    %936 = vmatprep.subr.mxu0 0.0
    %937 = vmatpush1.msra.mxu0 %v932
    %938 = vmatprep.subr.mxu0 0.0
    %939 = vmatpush1.msra.mxu0 0.0
    %940 = vmatprep.subr.mxu0 0.0
    %941 = vmatpush1.msra.mxu0 0.0
    %942 = vmatprep.subr.mxu0 0.0
    %943 = vmatpush1.msra.mxu0 0.0
    %944 = vmatprep.subr.mxu0 0.0
    %945 = vmatpush1.msra.mxu0 0.0
    %946 = vmatprep.subr.mxu0 0.0
    %947 = vmatpush1.msra.mxu0 0.0
    %948 = vmatprep.subr.mxu0 0.0
    %949 = vmatpush1.msra.mxu0 0.0
    %950 = vmatprep.subr.mxu0 0.0
    %951 = vmatpush1.msra.mxu0 0.0
    %952 = vmatprep.subr.mxu0 0.0
    %953 = vmatpush1.msra.mxu0 0.0
    %954 = vmatprep.subr.mxu0 0.0
    %955 = vmatpush1.msra.mxu0 0.0
    %956 = vmatprep.subr.mxu0 0.0
    %957 = vmatpush1.msra.mxu0 0.0
    %958 = vmatprep.subr.mxu0 0.0
    %959 = vmatpush1.msra.mxu0 0.0
    %960 = vmatprep.subr.mxu0 0.0
    %961 = vmatpush1.msra.mxu0 0.0
    %962 = vmatprep.subr.mxu0 0.0
    %963 = vmatpush1.msra.mxu0 0.0
    %964 = vmatprep.subr.mxu0 0.0
    %965 = vmatpush1.msra.mxu0 0.0
    %966 = vmatprep.subr.mxu0 0.0
    %967 = vmatpush1.msra.mxu0 0.0
    %968 = vmatprep.subr.mxu0 0.0
    %969 = vmatpush1.msra.mxu0 0.0
    %970 = vmatprep.subr.mxu0 0.0
    %971 = vmatpush1.msra.mxu0 0.0
    %972 = vmatprep.subr.mxu0 0.0
    %973 = vmatpush1.msra.mxu0 0.0
    %974 = vmatprep.subr.mxu0 0.0
    %975 = vmatpush1.msra.mxu0 0.0
    %976 = vmatprep.subr.mxu0 0.0
    %977 = vmatpush1.msra.mxu0 0.0
    %978 = vmatprep.subr.mxu0 0.0
    %979 = vmatpush1.msra.mxu0 0.0
    %980 = vmatprep.subr.mxu0 0.0
    %981 = vmatpush1.msra.mxu0 0.0
    %982 = vmatprep.subr.mxu0 0.0
    %983 = vmatpush1.msra.mxu0 0.0
    %984 = vmatprep.subr.mxu0 0.0
    %985 = vmatpush1.msra.mxu0 0.0
    %986 = vmatprep.subr.mxu0 0.0
    %987 = vmatpush1.msra.mxu0 0.0
    %988 = vmatprep.subr.mxu0 0.0
    %989 = vmatpush1.msra.mxu0 0.0
    %990 = vmatprep.subr.mxu0 0.0
    %991 = vmatpush1.msra.mxu0 0.0
    %992 = vmatprep.subr.mxu0 0.0
    %993 = vmatpush1.msra.mxu0 0.0
    %994 = vmatprep.subr.mxu0 0.0
    %995 = vmatpush1.msra.mxu0 0.0
    %996 = vmatprep.subr.mxu0 0.0
    %997 = vmatpush1.msra.mxu0 0.0
    %998 = vmatprep.mubr.f32.mxu0 0.0
    %999 = vmatmul.mubr.f32.gmra.mrb[0].mxu0 %v930
    %v1000 = vpop.f32.mrb[0].mxu0
    %v1001 = vadd.f32 0.0, %v1000
    %v1002 = vpop.f32.mrb[0].mxu0
    %1003 = vdwg.mxu0
    %1004 = vrot.lane.b32.xlu0 %v300, 32
    %v1005 = vpop.permute.xlu0 %1004
    %1006 = vrot.lane.b32.xlu0 %v391, 32
    %v1007 = vpop.permute.xlu0 %1006
    %1008 = vrot.lane.b32.xlu0 %v397, 32
    %v1009 = vpop.permute.xlu0 %1008
    %v1010 = vsel %vm486, %v1005, 0
    %v1012 = vsel %vm486, %v1007, 0
    %v1014 = vsel %vm486, %v1009, 0
    %1016 = vmatprep.subr.mxu0 0.0
    %1017 = vmatpush1.xpose.msra.mxu0 %v1012
    %1018 = vmatprep.subr.mxu0 0.0
    %1019 = vmatpush1.xpose.msra.mxu0 %v1014
    %1020 = vmatprep.subr.mxu0 0.0
    %1021 = vmatpush1.xpose.msra.mxu0 0.0
    %1022 = vmatprep.subr.mxu0 0.0
    %1023 = vmatpush1.xpose.msra.mxu0 0.0
    %1024 = vmatprep.subr.mxu0 0.0
    %1025 = vmatpush1.xpose.msra.mxu0 0.0
    %1026 = vmatprep.subr.mxu0 0.0
    %1027 = vmatpush1.xpose.msra.mxu0 0.0
    %1028 = vmatprep.subr.mxu0 0.0
    %1029 = vmatpush1.xpose.msra.mxu0 0.0
    %1030 = vmatprep.subr.mxu0 0.0
    %1031 = vmatpush1.xpose.msra.mxu0 0.0
    %1032 = vmatprep.subr.mxu0 0.0
    %1033 = vmatpush1.xpose.msra.mxu0 0.0
    %1034 = vmatprep.subr.mxu0 0.0
    %1035 = vmatpush1.xpose.msra.mxu0 0.0
    %1036 = vmatprep.subr.mxu0 0.0
    %1037 = vmatpush1.xpose.msra.mxu0 0.0
    %1038 = vmatprep.subr.mxu0 0.0
    %1039 = vmatpush1.xpose.msra.mxu0 0.0
    %1040 = vmatprep.subr.mxu0 0.0
    %1041 = vmatpush1.xpose.msra.mxu0 0.0
    %1042 = vmatprep.subr.mxu0 0.0
    %1043 = vmatpush1.xpose.msra.mxu0 0.0
    %1044 = vmatprep.subr.mxu0 0.0
    %1045 = vmatpush1.xpose.msra.mxu0 0.0
    %1046 = vmatprep.subr.mxu0 0.0
    %1047 = vmatpush1.xpose.msra.mxu0 0.0
    %1048 = vmatprep.subr.mxu0 0.0
    %1049 = vmatpush1.xpose.msra.mxu0 0.0
    %1050 = vmatprep.subr.mxu0 0.0
    %1051 = vmatpush1.xpose.msra.mxu0 0.0
    %1052 = vmatprep.subr.mxu0 0.0
    %1053 = vmatpush1.xpose.msra.mxu0 0.0
    %1054 = vmatprep.subr.mxu0 0.0
    %1055 = vmatpush1.xpose.msra.mxu0 0.0
    %1056 = vmatprep.subr.mxu0 0.0
    %1057 = vmatpush1.xpose.msra.mxu0 0.0
    %1058 = vmatprep.subr.mxu0 0.0
    %1059 = vmatpush1.xpose.msra.mxu0 0.0
    %1060 = vmatprep.subr.mxu0 0.0
    %1061 = vmatpush1.xpose.msra.mxu0 0.0
    %1062 = vmatprep.subr.mxu0 0.0
    %1063 = vmatpush1.xpose.msra.mxu0 0.0
    %1064 = vmatprep.subr.mxu0 0.0
    %1065 = vmatpush1.xpose.msra.mxu0 0.0
    %1066 = vmatprep.subr.mxu0 0.0
    %1067 = vmatpush1.xpose.msra.mxu0 0.0
    %1068 = vmatprep.subr.mxu0 0.0
    %1069 = vmatpush1.xpose.msra.mxu0 0.0
    %1070 = vmatprep.subr.mxu0 0.0
    %1071 = vmatpush1.xpose.msra.mxu0 0.0
    %1072 = vmatprep.subr.mxu0 0.0
    %1073 = vmatpush1.xpose.msra.mxu0 0.0
    %1074 = vmatprep.subr.mxu0 0.0
    %1075 = vmatpush1.xpose.msra.mxu0 0.0
    %1076 = vmatprep.subr.mxu0 0.0
    %1077 = vmatpush1.xpose.msra.mxu0 0.0
    %1078 = vmatprep.subr.mxu0 0.0
    %1079 = vmatpush1.xpose.msra.mxu0 0.0
    %1080 = vmatprep.mubr.f32.mxu0 0.0
    %1081 = vmatmul.mubr.f32.gmra.mrb[0].mxu0 %v1010
    %v1082 = vpop.f32.mrb[0].mxu0
    %v1083 = vadd.f32 0.0, %v1082
    %v1084 = vpop.f32.mrb[0].mxu0
    %1085 = vdwg.mxu0
    %v1086 = vsel %vm485, %v1083, -1e+30
    %v1087 = vsel %vm567, %v1086, -inf
    %1088 = vmax.xlane.f32.xlu0 %v1087
    %v1089 = vpop.xlane.xlu0 %1088
    %v1090 = vsub.f32 %v1086, %v1089
    %v1091 = vmul.f32 %v1090, 1.442695
    %v1092 = vpow.pop %v1091
    %v1093 = vsel %vm567, %v1092, 0.0
    %1094 = vadd.xlane.f32.xlu0 %v1093
    %v1095 = vpop.xlane.xlu0 %1094
    %v1096 = vrcp.pop %v1095
    %v1097 = vmul.f32 %v1092, %v1096
    %1098 = vrot.lane.b32.xlu0 %v468, 32
    %v1099 = vpop.permute.xlu0 %1098
    %1100 = vrot.lane.b32.xlu0 %v474, 32
    %v1101 = vpop.permute.xlu0 %1100
    %v1104 = vsel %vm567, %v1097, 0
    %v1106 = vsel %vm222, %v1101, 0
    %1108 = vmatprep.subr.mxu0 0.0
    %1109 = vmatpush1.msra.mxu0 %v1099
    %1110 = vmatprep.subr.mxu0 0.0
    %1111 = vmatpush1.msra.mxu0 %v1106
    %1112 = vmatprep.subr.mxu0 0.0
    %1113 = vmatpush1.msra.mxu0 0.0
    %1114 = vmatprep.subr.mxu0 0.0
    %1115 = vmatpush1.msra.mxu0 0.0
    %1116 = vmatprep.subr.mxu0 0.0
    %1117 = vmatpush1.msra.mxu0 0.0
    %1118 = vmatprep.subr.mxu0 0.0
    %1119 = vmatpush1.msra.mxu0 0.0
    %1120 = vmatprep.subr.mxu0 0.0
    %1121 = vmatpush1.msra.mxu0 0.0
    %1122 = vmatprep.subr.mxu0 0.0
    %1123 = vmatpush1.msra.mxu0 0.0
    %1124 = vmatprep.subr.mxu0 0.0
    %1125 = vmatpush1.msra.mxu0 0.0
    %1126 = vmatprep.subr.mxu0 0.0
    %1127 = vmatpush1.msra.mxu0 0.0
    %1128 = vmatprep.subr.mxu0 0.0
    %1129 = vmatpush1.msra.mxu0 0.0
    %1130 = vmatprep.subr.mxu0 0.0
    %1131 = vmatpush1.msra.mxu0 0.0
    %1132 = vmatprep.subr.mxu0 0.0
    %1133 = vmatpush1.msra.mxu0 0.0
    %1134 = vmatprep.subr.mxu0 0.0
    %1135 = vmatpush1.msra.mxu0 0.0
    %1136 = vmatprep.subr.mxu0 0.0
    %1137 = vmatpush1.msra.mxu0 0.0
    %1138 = vmatprep.subr.mxu0 0.0
    %1139 = vmatpush1.msra.mxu0 0.0
    %1140 = vmatprep.subr.mxu0 0.0
    %1141 = vmatpush1.msra.mxu0 0.0
    %1142 = vmatprep.subr.mxu0 0.0
    %1143 = vmatpush1.msra.mxu0 0.0
    %1144 = vmatprep.subr.mxu0 0.0
    %1145 = vmatpush1.msra.mxu0 0.0
    %1146 = vmatprep.subr.mxu0 0.0
    %1147 = vmatpush1.msra.mxu0 0.0
    %1148 = vmatprep.subr.mxu0 0.0
    %1149 = vmatpush1.msra.mxu0 0.0
    %1150 = vmatprep.subr.mxu0 0.0
    %1151 = vmatpush1.msra.mxu0 0.0
    %1152 = vmatprep.subr.mxu0 0.0
    %1153 = vmatpush1.msra.mxu0 0.0
    %1154 = vmatprep.subr.mxu0 0.0
    %1155 = vmatpush1.msra.mxu0 0.0
    %1156 = vmatprep.subr.mxu0 0.0
    %1157 = vmatpush1.msra.mxu0 0.0
    %1158 = vmatprep.subr.mxu0 0.0
    %1159 = vmatpush1.msra.mxu0 0.0
    %1160 = vmatprep.subr.mxu0 0.0
    %1161 = vmatpush1.msra.mxu0 0.0
    %1162 = vmatprep.subr.mxu0 0.0
    %1163 = vmatpush1.msra.mxu0 0.0
    %1164 = vmatprep.subr.mxu0 0.0
    %1165 = vmatpush1.msra.mxu0 0.0
    %1166 = vmatprep.subr.mxu0 0.0
    %1167 = vmatpush1.msra.mxu0 0.0
    %1168 = vmatprep.subr.mxu0 0.0
    %1169 = vmatpush1.msra.mxu0 0.0
    %1170 = vmatprep.subr.mxu0 0.0
    %1171 = vmatpush1.msra.mxu0 0.0
    %1172 = vmatprep.mubr.f32.mxu0 0.0
    %1173 = vmatmul.mubr.f32.gmra.mrb[0].mxu0 %v1104
    %v1174 = vpop.f32.mrb[0].mxu0
    %v1175 = vadd.f32 0.0, %v1174
    %v1176 = vpop.f32.mrb[0].mxu0
    %1177 = vdwg.mxu0
    %v1179 = vsel %vm486, %v301, 0
    %v1182 = vsel %vm486, %v393, 0
    %v1185 = vsel %vm486, %v399, 0
    %1187 = vmatprep.subr.mxu0 0.0
    %1188 = vmatpush1.xpose.msra.mxu0 %v1182
    %1189 = vmatprep.subr.mxu0 0.0
    %1190 = vmatpush1.xpose.msra.mxu0 %v1185
    %1191 = vmatprep.subr.mxu0 0.0
    %1192 = vmatpush1.xpose.msra.mxu0 0.0
    %1193 = vmatprep.subr.mxu0 0.0
    %1194 = vmatpush1.xpose.msra.mxu0 0.0
    %1195 = vmatprep.subr.mxu0 0.0
    %1196 = vmatpush1.xpose.msra.mxu0 0.0
    %1197 = vmatprep.subr.mxu0 0.0
    %1198 = vmatpush1.xpose.msra.mxu0 0.0
    %1199 = vmatprep.subr.mxu0 0.0
    %1200 = vmatpush1.xpose.msra.mxu0 0.0
    %1201 = vmatprep.subr.mxu0 0.0
    %1202 = vmatpush1.xpose.msra.mxu0 0.0
    %1203 = vmatprep.subr.mxu0 0.0
    %1204 = vmatpush1.xpose.msra.mxu0 0.0
    %1205 = vmatprep.subr.mxu0 0.0
    %1206 = vmatpush1.xpose.msra.mxu0 0.0
    %1207 = vmatprep.subr.mxu0 0.0
    %1208 = vmatpush1.xpose.msra.mxu0 0.0
    %1209 = vmatprep.subr.mxu0 0.0
    %1210 = vmatpush1.xpose.msra.mxu0 0.0
    %1211 = vmatprep.subr.mxu0 0.0
    %1212 = vmatpush1.xpose.msra.mxu0 0.0
    %1213 = vmatprep.subr.mxu0 0.0
    %1214 = vmatpush1.xpose.msra.mxu0 0.0
    %1215 = vmatprep.subr.mxu0 0.0
    %1216 = vmatpush1.xpose.msra.mxu0 0.0
    %1217 = vmatprep.subr.mxu0 0.0
    %1218 = vmatpush1.xpose.msra.mxu0 0.0
    %1219 = vmatprep.subr.mxu0 0.0
    %1220 = vmatpush1.xpose.msra.mxu0 0.0
    %1221 = vmatprep.subr.mxu0 0.0
    %1222 = vmatpush1.xpose.msra.mxu0 0.0
    %1223 = vmatprep.subr.mxu0 0.0
    %1224 = vmatpush1.xpose.msra.mxu0 0.0
    %1225 = vmatprep.subr.mxu0 0.0
    %1226 = vmatpush1.xpose.msra.mxu0 0.0
    %1227 = vmatprep.subr.mxu0 0.0
    %1228 = vmatpush1.xpose.msra.mxu0 0.0
    %1229 = vmatprep.subr.mxu0 0.0
    %1230 = vmatpush1.xpose.msra.mxu0 0.0
    %1231 = vmatprep.subr.mxu0 0.0
    %1232 = vmatpush1.xpose.msra.mxu0 0.0
    %1233 = vmatprep.subr.mxu0 0.0
    %1234 = vmatpush1.xpose.msra.mxu0 0.0
    %1235 = vmatprep.subr.mxu0 0.0
    %1236 = vmatpush1.xpose.msra.mxu0 0.0
    %1237 = vmatprep.subr.mxu0 0.0
    %1238 = vmatpush1.xpose.msra.mxu0 0.0
    %1239 = vmatprep.subr.mxu0 0.0
    %1240 = vmatpush1.xpose.msra.mxu0 0.0
    %1241 = vmatprep.subr.mxu0 0.0
    %1242 = vmatpush1.xpose.msra.mxu0 0.0
    %1243 = vmatprep.subr.mxu0 0.0
    %1244 = vmatpush1.xpose.msra.mxu0 0.0
    %1245 = vmatprep.subr.mxu0 0.0
    %1246 = vmatpush1.xpose.msra.mxu0 0.0
    %1247 = vmatprep.subr.mxu0 0.0
    %1248 = vmatpush1.xpose.msra.mxu0 0.0
    %1249 = vmatprep.subr.mxu0 0.0
    %1250 = vmatpush1.xpose.msra.mxu0 0.0
    %1251 = vmatprep.mubr.f32.mxu0 0.0
    %1252 = vmatmul.mubr.f32.gmra.mrb[0].mxu0 %v1179
    %v1253 = vpop.f32.mrb[0].mxu0
    %v1254 = vadd.f32 0.0, %v1253
    %v1255 = vpop.f32.mrb[0].mxu0
    %1256 = vdwg.mxu0
    %v1257 = vsel %vm485, %v1254, -1e+30
    %v1258 = vsel %vm567, %v1257, -inf
    %1259 = vmax.xlane.f32.xlu0 %v1258
    %v1260 = vpop.xlane.xlu0 %1259
    %v1261 = vsub.f32 %v1257, %v1260
    %v1262 = vmul.f32 %v1261, 1.442695
    %v1263 = vpow.pop %v1262
    %v1264 = vsel %vm567, %v1263, 0.0
    %1265 = vadd.xlane.f32.xlu0 %v1264
    %v1266 = vpop.xlane.xlu0 %1265
    %v1267 = vrcp.pop %v1266
    %v1268 = vmul.f32 %v1263, %v1267
    %v1270 = vsel %vm567, %v1268, 0
    %v1273 = vsel %vm222, %v476, 0
    %1275 = vmatprep.subr.mxu0 0.0
    %1276 = vmatpush1.msra.mxu0 %v470
    %1277 = vmatprep.subr.mxu0 0.0
    %1278 = vmatpush1.msra.mxu0 %v1273
    %1279 = vmatprep.subr.mxu0 0.0
    %1280 = vmatpush1.msra.mxu0 0.0
    %1281 = vmatprep.subr.mxu0 0.0
    %1282 = vmatpush1.msra.mxu0 0.0
    %1283 = vmatprep.subr.mxu0 0.0
    %1284 = vmatpush1.msra.mxu0 0.0
    %1285 = vmatprep.subr.mxu0 0.0
    %1286 = vmatpush1.msra.mxu0 0.0
    %1287 = vmatprep.subr.mxu0 0.0
    %1288 = vmatpush1.msra.mxu0 0.0
    %1289 = vmatprep.subr.mxu0 0.0
    %1290 = vmatpush1.msra.mxu0 0.0
    %1291 = vmatprep.subr.mxu0 0.0
    %1292 = vmatpush1.msra.mxu0 0.0
    %1293 = vmatprep.subr.mxu0 0.0
    %1294 = vmatpush1.msra.mxu0 0.0
    %1295 = vmatprep.subr.mxu0 0.0
    %1296 = vmatpush1.msra.mxu0 0.0
    %1297 = vmatprep.subr.mxu0 0.0
    %1298 = vmatpush1.msra.mxu0 0.0
    %1299 = vmatprep.subr.mxu0 0.0
    %1300 = vmatpush1.msra.mxu0 0.0
    %1301 = vmatprep.subr.mxu0 0.0
    %1302 = vmatpush1.msra.mxu0 0.0
    %1303 = vmatprep.subr.mxu0 0.0
    %1304 = vmatpush1.msra.mxu0 0.0
    %1305 = vmatprep.subr.mxu0 0.0
    %1306 = vmatpush1.msra.mxu0 0.0
    %1307 = vmatprep.subr.mxu0 0.0
    %1308 = vmatpush1.msra.mxu0 0.0
    %1309 = vmatprep.subr.mxu0 0.0
    %1310 = vmatpush1.msra.mxu0 0.0
    %1311 = vmatprep.subr.mxu0 0.0
    %1312 = vmatpush1.msra.mxu0 0.0
    %1313 = vmatprep.subr.mxu0 0.0
    %1314 = vmatpush1.msra.mxu0 0.0
    %1315 = vmatprep.subr.mxu0 0.0
    %1316 = vmatpush1.msra.mxu0 0.0
    %1317 = vmatprep.subr.mxu0 0.0
    %1318 = vmatpush1.msra.mxu0 0.0
    %1319 = vmatprep.subr.mxu0 0.0
    %1320 = vmatpush1.msra.mxu0 0.0
    %1321 = vmatprep.subr.mxu0 0.0
    %1322 = vmatpush1.msra.mxu0 0.0
    %1323 = vmatprep.subr.mxu0 0.0
    %1324 = vmatpush1.msra.mxu0 0.0
    %1325 = vmatprep.subr.mxu0 0.0
    %1326 = vmatpush1.msra.mxu0 0.0
    %1327 = vmatprep.subr.mxu0 0.0
    %1328 = vmatpush1.msra.mxu0 0.0
    %1329 = vmatprep.subr.mxu0 0.0
    %1330 = vmatpush1.msra.mxu0 0.0
    %1331 = vmatprep.subr.mxu0 0.0
    %1332 = vmatpush1.msra.mxu0 0.0
    %1333 = vmatprep.subr.mxu0 0.0
    %1334 = vmatpush1.msra.mxu0 0.0
    %1335 = vmatprep.subr.mxu0 0.0
    %1336 = vmatpush1.msra.mxu0 0.0
    %1337 = vmatprep.subr.mxu0 0.0
    %1338 = vmatpush1.msra.mxu0 0.0
    %1339 = vmatprep.mubr.f32.mxu0 0.0
    %1340 = vmatmul.mubr.f32.gmra.mrb[0].mxu0 %v1270
    %v1341 = vpop.f32.mrb[0].mxu0
    %v1342 = vadd.f32 0.0, %v1341
    %v1343 = vpop.f32.mrb[0].mxu0
    %1344 = vdwg.mxu0
    %1345 = vrot.lane.b32.xlu0 %v301, 96
    %v1346 = vpop.permute.xlu0 %1345
    %1347 = vrot.lane.b32.xlu0 %v393, 96
    %v1348 = vpop.permute.xlu0 %1347
    %1349 = vrot.lane.b32.xlu0 %v399, 96
    %v1350 = vpop.permute.xlu0 %1349
    %v1351 = vsel %vm486, %v1346, 0
    %v1353 = vsel %vm486, %v1348, 0
    %v1355 = vsel %vm486, %v1350, 0
    %1357 = vmatprep.subr.mxu0 0.0
    %1358 = vmatpush1.xpose.msra.mxu0 %v1353
    %1359 = vmatprep.subr.mxu0 0.0
    %1360 = vmatpush1.xpose.msra.mxu0 %v1355
    %1361 = vmatprep.subr.mxu0 0.0
    %1362 = vmatpush1.xpose.msra.mxu0 0.0
    %1363 = vmatprep.subr.mxu0 0.0
    %1364 = vmatpush1.xpose.msra.mxu0 0.0
    %1365 = vmatprep.subr.mxu0 0.0
    %1366 = vmatpush1.xpose.msra.mxu0 0.0
    %1367 = vmatprep.subr.mxu0 0.0
    %1368 = vmatpush1.xpose.msra.mxu0 0.0
    %1369 = vmatprep.subr.mxu0 0.0
    %1370 = vmatpush1.xpose.msra.mxu0 0.0
    %1371 = vmatprep.subr.mxu0 0.0
    %1372 = vmatpush1.xpose.msra.mxu0 0.0
    %1373 = vmatprep.subr.mxu0 0.0
    %1374 = vmatpush1.xpose.msra.mxu0 0.0
    %1375 = vmatprep.subr.mxu0 0.0
    %1376 = vmatpush1.xpose.msra.mxu0 0.0
    %1377 = vmatprep.subr.mxu0 0.0
    %1378 = vmatpush1.xpose.msra.mxu0 0.0
    %1379 = vmatprep.subr.mxu0 0.0
    %1380 = vmatpush1.xpose.msra.mxu0 0.0
    %1381 = vmatprep.subr.mxu0 0.0
    %1382 = vmatpush1.xpose.msra.mxu0 0.0
    %1383 = vmatprep.subr.mxu0 0.0
    %1384 = vmatpush1.xpose.msra.mxu0 0.0
    %1385 = vmatprep.subr.mxu0 0.0
    %1386 = vmatpush1.xpose.msra.mxu0 0.0
    %1387 = vmatprep.subr.mxu0 0.0
    %1388 = vmatpush1.xpose.msra.mxu0 0.0
    %1389 = vmatprep.subr.mxu0 0.0
    %1390 = vmatpush1.xpose.msra.mxu0 0.0
    %1391 = vmatprep.subr.mxu0 0.0
    %1392 = vmatpush1.xpose.msra.mxu0 0.0
    %1393 = vmatprep.subr.mxu0 0.0
    %1394 = vmatpush1.xpose.msra.mxu0 0.0
    %1395 = vmatprep.subr.mxu0 0.0
    %1396 = vmatpush1.xpose.msra.mxu0 0.0
    %1397 = vmatprep.subr.mxu0 0.0
    %1398 = vmatpush1.xpose.msra.mxu0 0.0
    %1399 = vmatprep.subr.mxu0 0.0
    %1400 = vmatpush1.xpose.msra.mxu0 0.0
    %1401 = vmatprep.subr.mxu0 0.0
    %1402 = vmatpush1.xpose.msra.mxu0 0.0
    %1403 = vmatprep.subr.mxu0 0.0
    %1404 = vmatpush1.xpose.msra.mxu0 0.0
    %1405 = vmatprep.subr.mxu0 0.0
    %1406 = vmatpush1.xpose.msra.mxu0 0.0
    %1407 = vmatprep.subr.mxu0 0.0
    %1408 = vmatpush1.xpose.msra.mxu0 0.0
    %1409 = vmatprep.subr.mxu0 0.0
    %1410 = vmatpush1.xpose.msra.mxu0 0.0
    %1411 = vmatprep.subr.mxu0 0.0
    %1412 = vmatpush1.xpose.msra.mxu0 0.0
    %1413 = vmatprep.subr.mxu0 0.0
    %1414 = vmatpush1.xpose.msra.mxu0 0.0
    %1415 = vmatprep.subr.mxu0 0.0
    %1416 = vmatpush1.xpose.msra.mxu0 0.0
    %1417 = vmatprep.subr.mxu0 0.0
    %1418 = vmatpush1.xpose.msra.mxu0 0.0
    %1419 = vmatprep.subr.mxu0 0.0
    %1420 = vmatpush1.xpose.msra.mxu0 0.0
    %1421 = vmatprep.mubr.f32.mxu0 0.0
    %1422 = vmatmul.mubr.f32.gmra.mrb[0].mxu0 %v1351
    %v1423 = vpop.f32.mrb[0].mxu0
    %v1424 = vadd.f32 0.0, %v1423
    %v1425 = vpop.f32.mrb[0].mxu0
    %1426 = vdwg.mxu0
    %v1427 = vsel %vm485, %v1424, -1e+30
    %v1428 = vsel %vm567, %v1427, -inf
    %1429 = vmax.xlane.f32.xlu0 %v1428
    %v1430 = vpop.xlane.xlu0 %1429
    %v1431 = vsub.f32 %v1427, %v1430
    %v1432 = vmul.f32 %v1431, 1.442695
    %v1433 = vpow.pop %v1432
    %v1434 = vsel %vm567, %v1433, 0.0
    %1435 = vadd.xlane.f32.xlu0 %v1434
    %v1436 = vpop.xlane.xlu0 %1435
    %v1437 = vrcp.pop %v1436
    %v1438 = vmul.f32 %v1433, %v1437
    %1440 = vrot.lane.b32.xlu0 %v470, 96
    %v1441 = vpop.permute.xlu0 %1440
    %1442 = vrot.lane.b32.xlu0 %v476, 96
    %v1443 = vpop.permute.xlu0 %1442
    %v1446 = vsel %vm567, %v1438, 0
    %v1448 = vsel %vm222, %v1443, 0
    %1450 = vmatprep.subr.mxu0 0.0
    %1451 = vmatpush1.msra.mxu0 %v1441
    %1452 = vmatprep.subr.mxu0 0.0
    %1453 = vmatpush1.msra.mxu0 %v1448
    %1454 = vmatprep.subr.mxu0 0.0
    %1455 = vmatpush1.msra.mxu0 0.0
    %1456 = vmatprep.subr.mxu0 0.0
    %1457 = vmatpush1.msra.mxu0 0.0
    %1458 = vmatprep.subr.mxu0 0.0
    %1459 = vmatpush1.msra.mxu0 0.0
    %1460 = vmatprep.subr.mxu0 0.0
    %1461 = vmatpush1.msra.mxu0 0.0
    %1462 = vmatprep.subr.mxu0 0.0
    %1463 = vmatpush1.msra.mxu0 0.0
    %1464 = vmatprep.subr.mxu0 0.0
    %1465 = vmatpush1.msra.mxu0 0.0
    %1466 = vmatprep.subr.mxu0 0.0
    %1467 = vmatpush1.msra.mxu0 0.0
    %1468 = vmatprep.subr.mxu0 0.0
    %1469 = vmatpush1.msra.mxu0 0.0
    %1470 = vmatprep.subr.mxu0 0.0
    %1471 = vmatpush1.msra.mxu0 0.0
    %1472 = vmatprep.subr.mxu0 0.0
    %1473 = vmatpush1.msra.mxu0 0.0
    %1474 = vmatprep.subr.mxu0 0.0
    %1475 = vmatpush1.msra.mxu0 0.0
    %1476 = vmatprep.subr.mxu0 0.0
    %1477 = vmatpush1.msra.mxu0 0.0
    %1478 = vmatprep.subr.mxu0 0.0
    %1479 = vmatpush1.msra.mxu0 0.0
    %1480 = vmatprep.subr.mxu0 0.0
    %1481 = vmatpush1.msra.mxu0 0.0
    %1482 = vmatprep.subr.mxu0 0.0
    %1483 = vmatpush1.msra.mxu0 0.0
    %1484 = vmatprep.subr.mxu0 0.0
    %1485 = vmatpush1.msra.mxu0 0.0
    %1486 = vmatprep.subr.mxu0 0.0
    %1487 = vmatpush1.msra.mxu0 0.0
    %1488 = vmatprep.subr.mxu0 0.0
    %1489 = vmatpush1.msra.mxu0 0.0
    %1490 = vmatprep.subr.mxu0 0.0
    %1491 = vmatpush1.msra.mxu0 0.0
    %1492 = vmatprep.subr.mxu0 0.0
    %1493 = vmatpush1.msra.mxu0 0.0
    %1494 = vmatprep.subr.mxu0 0.0
    %1495 = vmatpush1.msra.mxu0 0.0
    %1496 = vmatprep.subr.mxu0 0.0
    %1497 = vmatpush1.msra.mxu0 0.0
    %1498 = vmatprep.subr.mxu0 0.0
    %1499 = vmatpush1.msra.mxu0 0.0
    %1500 = vmatprep.subr.mxu0 0.0
    %1501 = vmatpush1.msra.mxu0 0.0
    %1502 = vmatprep.subr.mxu0 0.0
    %1503 = vmatpush1.msra.mxu0 0.0
    %1504 = vmatprep.subr.mxu0 0.0
    %1505 = vmatpush1.msra.mxu0 0.0
    %1506 = vmatprep.subr.mxu0 0.0
    %1507 = vmatpush1.msra.mxu0 0.0
    %1508 = vmatprep.subr.mxu0 0.0
    %1509 = vmatpush1.msra.mxu0 0.0
    %1510 = vmatprep.subr.mxu0 0.0
    %1511 = vmatpush1.msra.mxu0 0.0
    %1512 = vmatprep.subr.mxu0 0.0
    %1513 = vmatpush1.msra.mxu0 0.0
    %1514 = vmatprep.mubr.f32.mxu0 0.0
    %1515 = vmatmul.mubr.f32.gmra.mrb[0].mxu0 %v1446
    %v1516 = vpop.f32.mrb[0].mxu0
    %v1517 = vadd.f32 0.0, %v1516
    %v1518 = vpop.f32.mrb[0].mxu0
    %1519 = vdwg.mxu0
    %1520 = vrot.lane.b32.xlu0 %v301, 64
    %v1521 = vpop.permute.xlu0 %1520
    %1522 = vrot.lane.b32.xlu0 %v393, 64
    %v1523 = vpop.permute.xlu0 %1522
    %1524 = vrot.lane.b32.xlu0 %v399, 64
    %v1525 = vpop.permute.xlu0 %1524
    %v1526 = vsel %vm486, %v1521, 0
    %v1528 = vsel %vm486, %v1523, 0
    %v1530 = vsel %vm486, %v1525, 0
    %1532 = vmatprep.subr.mxu0 0.0
    %1533 = vmatpush1.xpose.msra.mxu0 %v1528
    %1534 = vmatprep.subr.mxu0 0.0
    %1535 = vmatpush1.xpose.msra.mxu0 %v1530
    %1536 = vmatprep.subr.mxu0 0.0
    %1537 = vmatpush1.xpose.msra.mxu0 0.0
    %1538 = vmatprep.subr.mxu0 0.0
    %1539 = vmatpush1.xpose.msra.mxu0 0.0
    %1540 = vmatprep.subr.mxu0 0.0
    %1541 = vmatpush1.xpose.msra.mxu0 0.0
    %1542 = vmatprep.subr.mxu0 0.0
    %1543 = vmatpush1.xpose.msra.mxu0 0.0
    %1544 = vmatprep.subr.mxu0 0.0
    %1545 = vmatpush1.xpose.msra.mxu0 0.0
    %1546 = vmatprep.subr.mxu0 0.0
    %1547 = vmatpush1.xpose.msra.mxu0 0.0
    %1548 = vmatprep.subr.mxu0 0.0
    %1549 = vmatpush1.xpose.msra.mxu0 0.0
    %1550 = vmatprep.subr.mxu0 0.0
    %1551 = vmatpush1.xpose.msra.mxu0 0.0
    %1552 = vmatprep.subr.mxu0 0.0
    %1553 = vmatpush1.xpose.msra.mxu0 0.0
    %1554 = vmatprep.subr.mxu0 0.0
    %1555 = vmatpush1.xpose.msra.mxu0 0.0
    %1556 = vmatprep.subr.mxu0 0.0
    %1557 = vmatpush1.xpose.msra.mxu0 0.0
    %1558 = vmatprep.subr.mxu0 0.0
    %1559 = vmatpush1.xpose.msra.mxu0 0.0
    %1560 = vmatprep.subr.mxu0 0.0
    %1561 = vmatpush1.xpose.msra.mxu0 0.0
    %1562 = vmatprep.subr.mxu0 0.0
    %1563 = vmatpush1.xpose.msra.mxu0 0.0
    %1564 = vmatprep.subr.mxu0 0.0
    %1565 = vmatpush1.xpose.msra.mxu0 0.0
    %1566 = vmatprep.subr.mxu0 0.0
    %1567 = vmatpush1.xpose.msra.mxu0 0.0
    %1568 = vmatprep.subr.mxu0 0.0
    %1569 = vmatpush1.xpose.msra.mxu0 0.0
    %1570 = vmatprep.subr.mxu0 0.0
    %1571 = vmatpush1.xpose.msra.mxu0 0.0
    %1572 = vmatprep.subr.mxu0 0.0
    %1573 = vmatpush1.xpose.msra.mxu0 0.0
    %1574 = vmatprep.subr.mxu0 0.0
    %1575 = vmatpush1.xpose.msra.mxu0 0.0
    %1576 = vmatprep.subr.mxu0 0.0
    %1577 = vmatpush1.xpose.msra.mxu0 0.0
    %1578 = vmatprep.subr.mxu0 0.0
    %1579 = vmatpush1.xpose.msra.mxu0 0.0
    %1580 = vmatprep.subr.mxu0 0.0
    %1581 = vmatpush1.xpose.msra.mxu0 0.0
    %1582 = vmatprep.subr.mxu0 0.0
    %1583 = vmatpush1.xpose.msra.mxu0 0.0
    %1584 = vmatprep.subr.mxu0 0.0
    %1585 = vmatpush1.xpose.msra.mxu0 0.0
    %1586 = vmatprep.subr.mxu0 0.0
    %1587 = vmatpush1.xpose.msra.mxu0 0.0
    %1588 = vmatprep.subr.mxu0 0.0
    %1589 = vmatpush1.xpose.msra.mxu0 0.0
    %1590 = vmatprep.subr.mxu0 0.0
    %1591 = vmatpush1.xpose.msra.mxu0 0.0
    %1592 = vmatprep.subr.mxu0 0.0
    %1593 = vmatpush1.xpose.msra.mxu0 0.0
    %1594 = vmatprep.subr.mxu0 0.0
    %1595 = vmatpush1.xpose.msra.mxu0 0.0
    %1596 = vmatprep.mubr.f32.mxu0 0.0
    %1597 = vmatmul.mubr.f32.gmra.mrb[0].mxu0 %v1526
    %v1598 = vpop.f32.mrb[0].mxu0
    %v1599 = vadd.f32 0.0, %v1598
    %v1600 = vpop.f32.mrb[0].mxu0
    %1601 = vdwg.mxu0
    %v1602 = vsel %vm485, %v1599, -1e+30
    %v1603 = vsel %vm567, %v1602, -inf
    %1604 = vmax.xlane.f32.xlu0 %v1603
    %v1605 = vpop.xlane.xlu0 %1604
    %v1606 = vsub.f32 %v1602, %v1605
    %v1607 = vmul.f32 %v1606, 1.442695
    %v1608 = vpow.pop %v1607
    %v1609 = vsel %vm567, %v1608, 0.0
    %1610 = vadd.xlane.f32.xlu0 %v1609
    %v1611 = vpop.xlane.xlu0 %1610
    %v1612 = vrcp.pop %v1611
    %v1613 = vmul.f32 %v1608, %v1612
    %1614 = vrot.lane.b32.xlu0 %v470, 64
    %v1615 = vpop.permute.xlu0 %1614
    %1616 = vrot.lane.b32.xlu0 %v476, 64
    %v1617 = vpop.permute.xlu0 %1616
    %v1620 = vsel %vm567, %v1613, 0
    %v1622 = vsel %vm222, %v1617, 0
    %1624 = vmatprep.subr.mxu0 0.0
    %1625 = vmatpush1.msra.mxu0 %v1615
    %1626 = vmatprep.subr.mxu0 0.0
    %1627 = vmatpush1.msra.mxu0 %v1622
    %1628 = vmatprep.subr.mxu0 0.0
    %1629 = vmatpush1.msra.mxu0 0.0
    %1630 = vmatprep.subr.mxu0 0.0
    %1631 = vmatpush1.msra.mxu0 0.0
    %1632 = vmatprep.subr.mxu0 0.0
    %1633 = vmatpush1.msra.mxu0 0.0
    %1634 = vmatprep.subr.mxu0 0.0
    %1635 = vmatpush1.msra.mxu0 0.0
    %1636 = vmatprep.subr.mxu0 0.0
    %1637 = vmatpush1.msra.mxu0 0.0
    %1638 = vmatprep.subr.mxu0 0.0
    %1639 = vmatpush1.msra.mxu0 0.0
    %1640 = vmatprep.subr.mxu0 0.0
    %1641 = vmatpush1.msra.mxu0 0.0
    %1642 = vmatprep.subr.mxu0 0.0
    %1643 = vmatpush1.msra.mxu0 0.0
    %1644 = vmatprep.subr.mxu0 0.0
    %1645 = vmatpush1.msra.mxu0 0.0
    %1646 = vmatprep.subr.mxu0 0.0
    %1647 = vmatpush1.msra.mxu0 0.0
    %1648 = vmatprep.subr.mxu0 0.0
    %1649 = vmatpush1.msra.mxu0 0.0
    %1650 = vmatprep.subr.mxu0 0.0
    %1651 = vmatpush1.msra.mxu0 0.0
    %1652 = vmatprep.subr.mxu0 0.0
    %1653 = vmatpush1.msra.mxu0 0.0
    %1654 = vmatprep.subr.mxu0 0.0
    %1655 = vmatpush1.msra.mxu0 0.0
    %1656 = vmatprep.subr.mxu0 0.0
    %1657 = vmatpush1.msra.mxu0 0.0
    %1658 = vmatprep.subr.mxu0 0.0
    %1659 = vmatpush1.msra.mxu0 0.0
    %1660 = vmatprep.subr.mxu0 0.0
    %1661 = vmatpush1.msra.mxu0 0.0
    %1662 = vmatprep.subr.mxu0 0.0
    %1663 = vmatpush1.msra.mxu0 0.0
    %1664 = vmatprep.subr.mxu0 0.0
    %1665 = vmatpush1.msra.mxu0 0.0
    %1666 = vmatprep.subr.mxu0 0.0
    %1667 = vmatpush1.msra.mxu0 0.0
    %1668 = vmatprep.subr.mxu0 0.0
    %1669 = vmatpush1.msra.mxu0 0.0
    %1670 = vmatprep.subr.mxu0 0.0
    %1671 = vmatpush1.msra.mxu0 0.0
    %1672 = vmatprep.subr.mxu0 0.0
    %1673 = vmatpush1.msra.mxu0 0.0
    %1674 = vmatprep.subr.mxu0 0.0
    %1675 = vmatpush1.msra.mxu0 0.0
    %1676 = vmatprep.subr.mxu0 0.0
    %1677 = vmatpush1.msra.mxu0 0.0
    %1678 = vmatprep.subr.mxu0 0.0
    %1679 = vmatpush1.msra.mxu0 0.0
    %1680 = vmatprep.subr.mxu0 0.0
    %1681 = vmatpush1.msra.mxu0 0.0
    %1682 = vmatprep.subr.mxu0 0.0
    %1683 = vmatpush1.msra.mxu0 0.0
    %1684 = vmatprep.subr.mxu0 0.0
    %1685 = vmatpush1.msra.mxu0 0.0
    %1686 = vmatprep.subr.mxu0 0.0
    %1687 = vmatpush1.msra.mxu0 0.0
    %1688 = vmatprep.mubr.f32.mxu0 0.0
    %1689 = vmatmul.mubr.f32.gmra.mrb[0].mxu0 %v1620
    %v1690 = vpop.f32.mrb[0].mxu0
    %v1691 = vadd.f32 0.0, %v1690
    %v1692 = vpop.f32.mrb[0].mxu0
    %1693 = vdwg.mxu0
    %1694 = vrot.lane.b32.xlu0 %v301, 32
    %v1695 = vpop.permute.xlu0 %1694
    %1696 = vrot.lane.b32.xlu0 %v393, 32
    %v1697 = vpop.permute.xlu0 %1696
    %1698 = vrot.lane.b32.xlu0 %v399, 32
    %v1699 = vpop.permute.xlu0 %1698
    %v1700 = vsel %vm486, %v1695, 0
    %v1702 = vsel %vm486, %v1697, 0
    %v1704 = vsel %vm486, %v1699, 0
    %1706 = vmatprep.subr.mxu0 0.0
    %1707 = vmatpush1.xpose.msra.mxu0 %v1702
    %1708 = vmatprep.subr.mxu0 0.0
    %1709 = vmatpush1.xpose.msra.mxu0 %v1704
    %1710 = vmatprep.subr.mxu0 0.0
    %1711 = vmatpush1.xpose.msra.mxu0 0.0
    %1712 = vmatprep.subr.mxu0 0.0
    %1713 = vmatpush1.xpose.msra.mxu0 0.0
    %1714 = vmatprep.subr.mxu0 0.0
    %1715 = vmatpush1.xpose.msra.mxu0 0.0
    %1716 = vmatprep.subr.mxu0 0.0
    %1717 = vmatpush1.xpose.msra.mxu0 0.0
    %1718 = vmatprep.subr.mxu0 0.0
    %1719 = vmatpush1.xpose.msra.mxu0 0.0
    %1720 = vmatprep.subr.mxu0 0.0
    %1721 = vmatpush1.xpose.msra.mxu0 0.0
    %1722 = vmatprep.subr.mxu0 0.0
    %1723 = vmatpush1.xpose.msra.mxu0 0.0
    %1724 = vmatprep.subr.mxu0 0.0
    %1725 = vmatpush1.xpose.msra.mxu0 0.0
    %1726 = vmatprep.subr.mxu0 0.0
    %1727 = vmatpush1.xpose.msra.mxu0 0.0
    %1728 = vmatprep.subr.mxu0 0.0
    %1729 = vmatpush1.xpose.msra.mxu0 0.0
    %1730 = vmatprep.subr.mxu0 0.0
    %1731 = vmatpush1.xpose.msra.mxu0 0.0
    %1732 = vmatprep.subr.mxu0 0.0
    %1733 = vmatpush1.xpose.msra.mxu0 0.0
    %1734 = vmatprep.subr.mxu0 0.0
    %1735 = vmatpush1.xpose.msra.mxu0 0.0
    %1736 = vmatprep.subr.mxu0 0.0
    %1737 = vmatpush1.xpose.msra.mxu0 0.0
    %1738 = vmatprep.subr.mxu0 0.0
    %1739 = vmatpush1.xpose.msra.mxu0 0.0
    %1740 = vmatprep.subr.mxu0 0.0
    %1741 = vmatpush1.xpose.msra.mxu0 0.0
    %1742 = vmatprep.subr.mxu0 0.0
    %1743 = vmatpush1.xpose.msra.mxu0 0.0
    %1744 = vmatprep.subr.mxu0 0.0
    %1745 = vmatpush1.xpose.msra.mxu0 0.0
    %1746 = vmatprep.subr.mxu0 0.0
    %1747 = vmatpush1.xpose.msra.mxu0 0.0
    %1748 = vmatprep.subr.mxu0 0.0
    %1749 = vmatpush1.xpose.msra.mxu0 0.0
    %1750 = vmatprep.subr.mxu0 0.0
    %1751 = vmatpush1.xpose.msra.mxu0 0.0
    %1752 = vmatprep.subr.mxu0 0.0
    %1753 = vmatpush1.xpose.msra.mxu0 0.0
    %1754 = vmatprep.subr.mxu0 0.0
    %1755 = vmatpush1.xpose.msra.mxu0 0.0
    %1756 = vmatprep.subr.mxu0 0.0
    %1757 = vmatpush1.xpose.msra.mxu0 0.0
    %1758 = vmatprep.subr.mxu0 0.0
    %1759 = vmatpush1.xpose.msra.mxu0 0.0
    %1760 = vmatprep.subr.mxu0 0.0
    %1761 = vmatpush1.xpose.msra.mxu0 0.0
    %1762 = vmatprep.subr.mxu0 0.0
    %1763 = vmatpush1.xpose.msra.mxu0 0.0
    %1764 = vmatprep.subr.mxu0 0.0
    %1765 = vmatpush1.xpose.msra.mxu0 0.0
    %1766 = vmatprep.subr.mxu0 0.0
    %1767 = vmatpush1.xpose.msra.mxu0 0.0
    %1768 = vmatprep.subr.mxu0 0.0
    %1769 = vmatpush1.xpose.msra.mxu0 0.0
    %1770 = vmatprep.mubr.f32.mxu0 0.0
    %1771 = vmatmul.mubr.f32.gmra.mrb[0].mxu0 %v1700
    %v1772 = vpop.f32.mrb[0].mxu0
    %v1773 = vadd.f32 0.0, %v1772
    %v1774 = vpop.f32.mrb[0].mxu0
    %1775 = vdwg.mxu0
    %v1776 = vsel %vm485, %v1773, -1e+30
    %v1777 = vsel %vm567, %v1776, -inf
    %1778 = vmax.xlane.f32.xlu0 %v1777
    %v1779 = vpop.xlane.xlu0 %1778
    %v1780 = vsub.f32 %v1776, %v1779
    %v1781 = vmul.f32 %v1780, 1.442695
    %v1782 = vpow.pop %v1781
    %v1783 = vsel %vm567, %v1782, 0.0
    %1784 = vadd.xlane.f32.xlu0 %v1783
    %v1785 = vpop.xlane.xlu0 %1784
    %v1786 = vrcp.pop %v1785
    %v1787 = vmul.f32 %v1782, %v1786
    %1788 = vrot.lane.b32.xlu0 %v470, 32
    %v1789 = vpop.permute.xlu0 %1788
    %1790 = vrot.lane.b32.xlu0 %v476, 32
    %v1791 = vpop.permute.xlu0 %1790
    %v1794 = vsel %vm567, %v1787, 0
    %v1796 = vsel %vm222, %v1791, 0
    %1798 = vmatprep.subr.mxu0 0.0
    %1799 = vmatpush1.msra.mxu0 %v1789
    %1800 = vmatprep.subr.mxu0 0.0
    %1801 = vmatpush1.msra.mxu0 %v1796
    %1802 = vmatprep.subr.mxu0 0.0
    %1803 = vmatpush1.msra.mxu0 0.0
    %1804 = vmatprep.subr.mxu0 0.0
    %1805 = vmatpush1.msra.mxu0 0.0
    %1806 = vmatprep.subr.mxu0 0.0
    %1807 = vmatpush1.msra.mxu0 0.0
    %1808 = vmatprep.subr.mxu0 0.0
    %1809 = vmatpush1.msra.mxu0 0.0
    %1810 = vmatprep.subr.mxu0 0.0
    %1811 = vmatpush1.msra.mxu0 0.0
    %1812 = vmatprep.subr.mxu0 0.0
    %1813 = vmatpush1.msra.mxu0 0.0
    %1814 = vmatprep.subr.mxu0 0.0
    %1815 = vmatpush1.msra.mxu0 0.0
    %1816 = vmatprep.subr.mxu0 0.0
    %1817 = vmatpush1.msra.mxu0 0.0
    %1818 = vmatprep.subr.mxu0 0.0
    %1819 = vmatpush1.msra.mxu0 0.0
    %1820 = vmatprep.subr.mxu0 0.0
    %1821 = vmatpush1.msra.mxu0 0.0
    %1822 = vmatprep.subr.mxu0 0.0
    %1823 = vmatpush1.msra.mxu0 0.0
    %1824 = vmatprep.subr.mxu0 0.0
    %1825 = vmatpush1.msra.mxu0 0.0
    %1826 = vmatprep.subr.mxu0 0.0
    %1827 = vmatpush1.msra.mxu0 0.0
    %1828 = vmatprep.subr.mxu0 0.0
    %1829 = vmatpush1.msra.mxu0 0.0
    %1830 = vmatprep.subr.mxu0 0.0
    %1831 = vmatpush1.msra.mxu0 0.0
    %1832 = vmatprep.subr.mxu0 0.0
    %1833 = vmatpush1.msra.mxu0 0.0
    %1834 = vmatprep.subr.mxu0 0.0
    %1835 = vmatpush1.msra.mxu0 0.0
    %1836 = vmatprep.subr.mxu0 0.0
    %1837 = vmatpush1.msra.mxu0 0.0
    %1838 = vmatprep.subr.mxu0 0.0
    %1839 = vmatpush1.msra.mxu0 0.0
    %1840 = vmatprep.subr.mxu0 0.0
    %1841 = vmatpush1.msra.mxu0 0.0
    %1842 = vmatprep.subr.mxu0 0.0
    %1843 = vmatpush1.msra.mxu0 0.0
    %1844 = vmatprep.subr.mxu0 0.0
    %1845 = vmatpush1.msra.mxu0 0.0
    %1846 = vmatprep.subr.mxu0 0.0
    %1847 = vmatpush1.msra.mxu0 0.0
    %1848 = vmatprep.subr.mxu0 0.0
    %1849 = vmatpush1.msra.mxu0 0.0
    %1850 = vmatprep.subr.mxu0 0.0
    %1851 = vmatpush1.msra.mxu0 0.0
    %1852 = vmatprep.subr.mxu0 0.0
    %1853 = vmatpush1.msra.mxu0 0.0
    %1854 = vmatprep.subr.mxu0 0.0
    %1855 = vmatpush1.msra.mxu0 0.0
    %1856 = vmatprep.subr.mxu0 0.0
    %1857 = vmatpush1.msra.mxu0 0.0
    %1858 = vmatprep.subr.mxu0 0.0
    %1859 = vmatpush1.msra.mxu0 0.0
    %1860 = vmatprep.subr.mxu0 0.0
    %1861 = vmatpush1.msra.mxu0 0.0
    %1862 = vmatprep.mubr.f32.mxu0 0.0
    %1863 = vmatmul.mubr.f32.gmra.mrb[0].mxu0 %v1794
    %v1864 = vpop.f32.mrb[0].mxu0
    %v1865 = vadd.f32 0.0, %v1864
    %v1866 = vpop.f32.mrb[0].mxu0
    %1867 = vdwg.mxu0
    %1869 = vrot.lane.b32.xlu0 %v827, 32
    %v1870 = vpop.permute.xlu0 %1869
    %1873 = vrot.lane.b32.xlu0 %v1001, 64
    %v1874 = vpop.permute.xlu0 %1873
    %1877 = vrot.lane.b32.xlu0 %v1175, 96
    %v1878 = vpop.permute.xlu0 %1877
    %1881 = vrot.lane.b32.xlu0 %v1517, 32
    %v1882 = vpop.permute.xlu0 %1881
    %1885 = vrot.lane.b32.xlu0 %v1691, 64
    %v1886 = vpop.permute.xlu0 %1885
    %1889 = vrot.lane.b32.xlu0 %v1865, 96
    %v1890 = vpop.permute.xlu0 %1889
    %v1892 = vsel %vm486, %v652, %v1870
    %vm1893 = vcmask 523264
    %v1894 = vsel %vm1893, %v1892, %v1874
    %vm1895 = vcmask 785408
    %v1896 = vsel %vm1895, %v1894, %v1878
    %v1897 = vsel %vm486, %v1342, %v1882
    %v1898 = vsel %vm1893, %v1897, %v1886
    %v1899 = vsel %vm1895, %v1898, %v1890
    %v1900 = vld [vmem:[%s5] sm:$0xff]
    %v1901 = vld [vmem:[%s5 + $0x8] sm:$0xff]
    %v1902 = vld [vmem:[%s5 + $0x10] sm:$0xff]
    %v1903 = vld [vmem:[%s5 + $0x18] sm:$0xff]
    %v1904 = vld [vmem:[%s5 + $0x20] sm:$0xff]
    %v1905 = vld [vmem:[%s5 + $0x28] sm:$0xff]
    %v1906 = vld [vmem:[%s5 + $0x30] sm:$0xff]
    %v1907 = vld [vmem:[%s5 + $0x38] sm:$0xff]
    %v1908 = vld [vmem:[%s5 + $0x40] sm:$0xff]
    %v1909 = vld [vmem:[%s5 + $0x48] sm:$0xff]
    %v1910 = vld [vmem:[%s5 + $0x50] sm:$0xff]
    %v1911 = vld [vmem:[%s5 + $0x58] sm:$0xff]
    %v1912 = vld [vmem:[%s5 + $0x60] sm:$0xff]
    %v1913 = vld [vmem:[%s5 + $0x68] sm:$0xff]
    %v1914 = vld [vmem:[%s5 + $0x70] sm:$0xff]
    %v1915 = vld [vmem:[%s5 + $0x78] sm:$0xff]
    %v1916 = vld [vmem:[%s5 + $0x80] sm:$0xff]
    %v1917 = vld [vmem:[%s5 + $0x88] sm:$0xff]
    %v1918 = vld [vmem:[%s5 + $0x90] sm:$0xff]
    %v1919 = vld [vmem:[%s5 + $0x98] sm:$0xff]
    %v1920 = vld [vmem:[%s5 + $0xa0] sm:$0xff]
    %v1921 = vld [vmem:[%s5 + $0xa8] sm:$0xff]
    %v1922 = vld [vmem:[%s5 + $0xb0] sm:$0xff]
    %v1923 = vld [vmem:[%s5 + $0xb8] sm:$0xff]
    %v1924 = vld [vmem:[%s5 + $0xc0] sm:$0xff]
    %v1925 = vld [vmem:[%s5 + $0xc8] sm:$0xff]
    %v1926 = vld [vmem:[%s5 + $0xd0] sm:$0xff]
    %v1927 = vld [vmem:[%s5 + $0xd8] sm:$0xff]
    %v1928 = vld [vmem:[%s5 + $0xe0] sm:$0xff]
    %v1929 = vld [vmem:[%s5 + $0xe8] sm:$0xff]
    %v1930 = vld [vmem:[%s5 + $0xf0] sm:$0xff]
    %v1931 = vld [vmem:[%s5 + $0xf8] sm:$0xff]
    %1932 = vmatprep.subr.mxu0 0.0
    %1933 = vmatpush1.msra.mxu0 %v1900
    %1934 = vmatprep.subr.mxu0 0.0
    %1935 = vmatpush1.msra.mxu0 %v1901
    %1936 = vmatprep.subr.mxu0 0.0
    %1937 = vmatpush1.msra.mxu0 %v1902
    %1938 = vmatprep.subr.mxu0 0.0
    %1939 = vmatpush1.msra.mxu0 %v1903
    %1940 = vmatprep.subr.mxu0 0.0
    %1941 = vmatpush1.msra.mxu0 %v1904
    %1942 = vmatprep.subr.mxu0 0.0
    %1943 = vmatpush1.msra.mxu0 %v1905
    %1944 = vmatprep.subr.mxu0 0.0
    %1945 = vmatpush1.msra.mxu0 %v1906
    %1946 = vmatprep.subr.mxu0 0.0
    %1947 = vmatpush1.msra.mxu0 %v1907
    %1948 = vmatprep.subr.mxu0 0.0
    %1949 = vmatpush1.msra.mxu0 %v1908
    %1950 = vmatprep.subr.mxu0 0.0
    %1951 = vmatpush1.msra.mxu0 %v1909
    %1952 = vmatprep.subr.mxu0 0.0
    %1953 = vmatpush1.msra.mxu0 %v1910
    %1954 = vmatprep.subr.mxu0 0.0
    %1955 = vmatpush1.msra.mxu0 %v1911
    %1956 = vmatprep.subr.mxu0 0.0
    %1957 = vmatpush1.msra.mxu0 %v1912
    %1958 = vmatprep.subr.mxu0 0.0
    %1959 = vmatpush1.msra.mxu0 %v1913
    %1960 = vmatprep.subr.mxu0 0.0
    %1961 = vmatpush1.msra.mxu0 %v1914
    %1962 = vmatprep.subr.mxu0 0.0
    %1963 = vmatpush1.msra.mxu0 %v1915
    %1964 = vmatprep.subr.mxu0 0.0
    %1965 = vmatpush1.msra.mxu0 %v1916
    %1966 = vmatprep.subr.mxu0 0.0
    %1967 = vmatpush1.msra.mxu0 %v1917
    %1968 = vmatprep.subr.mxu0 0.0
    %1969 = vmatpush1.msra.mxu0 %v1918
    %1970 = vmatprep.subr.mxu0 0.0
    %1971 = vmatpush1.msra.mxu0 %v1919
    %1972 = vmatprep.subr.mxu0 0.0
    %1973 = vmatpush1.msra.mxu0 %v1920
    %1974 = vmatprep.subr.mxu0 0.0
    %1975 = vmatpush1.msra.mxu0 %v1921
    %1976 = vmatprep.subr.mxu0 0.0
    %1977 = vmatpush1.msra.mxu0 %v1922
    %1978 = vmatprep.subr.mxu0 0.0
    %1979 = vmatpush1.msra.mxu0 %v1923
    %1980 = vmatprep.subr.mxu0 0.0
    %1981 = vmatpush1.msra.mxu0 %v1924
    %1982 = vmatprep.subr.mxu0 0.0
    %1983 = vmatpush1.msra.mxu0 %v1925
    %1984 = vmatprep.subr.mxu0 0.0
    %1985 = vmatpush1.msra.mxu0 %v1926
    %1986 = vmatprep.subr.mxu0 0.0
    %1987 = vmatpush1.msra.mxu0 %v1927
    %1988 = vmatprep.subr.mxu0 0.0
    %1989 = vmatpush1.msra.mxu0 %v1928
    %1990 = vmatprep.subr.mxu0 0.0
    %1991 = vmatpush1.msra.mxu0 %v1929
    %1992 = vmatprep.subr.mxu0 0.0
    %1993 = vmatpush1.msra.mxu0 %v1930
    %1994 = vmatprep.subr.mxu0 0.0
    %1995 = vmatpush1.msra.mxu0 %v1931
    %1996 = vmatprep.mubr.f32.mxu0 %v1899
    %1997 = vmatmul.mubr.f32.gmra.mrb[0].mxu0 %v1896
    %v1998 = vpop.f32.mrb[0].mxu0
    %v1999 = vadd.f32 %v213, %v1998
    %v2000 = vpop.f32.mrb[0].mxu0
    %2001 = vdwg.mxu0
    %v2002 = vld [vmem:[%s8] sm:$0x1]
    %v2003 = vld [vmem:[%s9] sm:$0x1]
    %v2004 = vsel %vm218, %v1999, 0.0
    %2005 = vadd.xlane.f32.xlu0 %v2004
    %v2006 = vpop.xlane.xlu0 %2005
    %v2007 = vrcp.pop 7.0
    %v2008 = vmul.f32 %v2006, %v2007
    %v2009 = vsub.f32 %v1999, %v2008
    %v2010 = vmul.f32 %v2009, %v2009
    %v2011 = vsel %vm218, %v2010, 0.0
    %2012 = vadd.xlane.f32.xlu0 %v2011
    %v2013 = vpop.xlane.xlu0 %2012
    %v2014 = vmul.f32 %v2013, %v2007
    %v2015 = vadd.f32 %v2014, 1e-05
    %v2016 = vrsqrt.pop %v2015
    %v2017 = vmul.f32 %v2009, %v2016
    %v2018 = vlaneseq
    %v2019 = vshrl.u32 %v2018, 7
    %v2020 = vsub.s32 0, %v2019
    %v2021 = vrot.slane %v2002, %v2020
    %v2022 = vmul.f32 %v2017, %v2021
    %v2023 = vlaneseq
    %v2024 = vshrl.u32 %v2023, 7
    %v2025 = vsub.s32 0, %v2024
    %v2026 = vrot.slane %v2003, %v2025
    %v2027 = vadd.f32 %v2022, %v2026
    %v2028 = vld [vmem:[%s6] sm:$0x7f]
    %v2030 = vsel %vm218, %v2027, 0
    %v2033 = vsel %vm222, %v2028, 0
    %2035 = vmatprep.subr.mxu0 0.0
    %2036 = vmatpush1.msra.mxu0 %v2033
    %2037 = vmatprep.subr.mxu0 0.0
    %2038 = vmatpush1.msra.mxu0 0.0
    %2039 = vmatprep.subr.mxu0 0.0
    %2040 = vmatpush1.msra.mxu0 0.0
    %2041 = vmatprep.subr.mxu0 0.0
    %2042 = vmatpush1.msra.mxu0 0.0
    %2043 = vmatprep.subr.mxu0 0.0
    %2044 = vmatpush1.msra.mxu0 0.0
    %2045 = vmatprep.subr.mxu0 0.0
    %2046 = vmatpush1.msra.mxu0 0.0
    %2047 = vmatprep.subr.mxu0 0.0
    %2048 = vmatpush1.msra.mxu0 0.0
    %2049 = vmatprep.subr.mxu0 0.0
    %2050 = vmatpush1.msra.mxu0 0.0
    %2051 = vmatprep.subr.mxu0 0.0
    %2052 = vmatpush1.msra.mxu0 0.0
    %2053 = vmatprep.subr.mxu0 0.0
    %2054 = vmatpush1.msra.mxu0 0.0
    %2055 = vmatprep.subr.mxu0 0.0
    %2056 = vmatpush1.msra.mxu0 0.0
    %2057 = vmatprep.subr.mxu0 0.0
    %2058 = vmatpush1.msra.mxu0 0.0
    %2059 = vmatprep.subr.mxu0 0.0
    %2060 = vmatpush1.msra.mxu0 0.0
    %2061 = vmatprep.subr.mxu0 0.0
    %2062 = vmatpush1.msra.mxu0 0.0
    %2063 = vmatprep.subr.mxu0 0.0
    %2064 = vmatpush1.msra.mxu0 0.0
    %2065 = vmatprep.subr.mxu0 0.0
    %2066 = vmatpush1.msra.mxu0 0.0
    %2067 = vmatprep.subr.mxu0 0.0
    %2068 = vmatpush1.msra.mxu0 0.0
    %2069 = vmatprep.subr.mxu0 0.0
    %2070 = vmatpush1.msra.mxu0 0.0
    %2071 = vmatprep.subr.mxu0 0.0
    %2072 = vmatpush1.msra.mxu0 0.0
    %2073 = vmatprep.subr.mxu0 0.0
    %2074 = vmatpush1.msra.mxu0 0.0
    %2075 = vmatprep.subr.mxu0 0.0
    %2076 = vmatpush1.msra.mxu0 0.0
    %2077 = vmatprep.subr.mxu0 0.0
    %2078 = vmatpush1.msra.mxu0 0.0
    %2079 = vmatprep.subr.mxu0 0.0
    %2080 = vmatpush1.msra.mxu0 0.0
    %2081 = vmatprep.subr.mxu0 0.0
    %2082 = vmatpush1.msra.mxu0 0.0
    %2083 = vmatprep.subr.mxu0 0.0
    %2084 = vmatpush1.msra.mxu0 0.0
    %2085 = vmatprep.subr.mxu0 0.0
    %2086 = vmatpush1.msra.mxu0 0.0
    %2087 = vmatprep.subr.mxu0 0.0
    %2088 = vmatpush1.msra.mxu0 0.0
    %2089 = vmatprep.subr.mxu0 0.0
    %2090 = vmatpush1.msra.mxu0 0.0
    %2091 = vmatprep.subr.mxu0 0.0
    %2092 = vmatpush1.msra.mxu0 0.0
    %2093 = vmatprep.subr.mxu0 0.0
    %2094 = vmatpush1.msra.mxu0 0.0
    %2095 = vmatprep.subr.mxu0 0.0
    %2096 = vmatpush1.msra.mxu0 0.0
    %2097 = vmatprep.subr.mxu0 0.0
    %2098 = vmatpush1.msra.mxu0 0.0
    %2099 = vmatprep.mubr.f32.mxu0 0.0
    %2100 = vmatmul.mubr.f32.gmra.mrb[0].mxu0 %v2030
    %v2101 = vpop.f32.mrb[0].mxu0
    %v2102 = vadd.f32 0.0, %v2101
    %v2103 = vpop.f32.mrb[0].mxu0
    %2104 = vdwg.mxu0
    %v2105 = vmax.f32 %v2102, 0.0
    %v2106 = vld [vmem:[%s7] sm:$0xff]
    %v2107 = vld [vmem:[%s7 + $0x8] sm:$0xff]
    %v2108 = vld [vmem:[%s7 + $0x10] sm:$0xff]
    %v2109 = vld [vmem:[%s7 + $0x18] sm:$0xff]
    %v2111 = vsel %vm486, %v2105, 0
    %2113 = vmatprep.subr.mxu0 0.0
    %2114 = vmatpush1.msra.mxu0 %v2106
    %2115 = vmatprep.subr.mxu0 0.0
    %2116 = vmatpush1.msra.mxu0 %v2107
    %2117 = vmatprep.subr.mxu0 0.0
    %2118 = vmatpush1.msra.mxu0 %v2108
    %2119 = vmatprep.subr.mxu0 0.0
    %2120 = vmatpush1.msra.mxu0 %v2109
    %2121 = vmatprep.subr.mxu0 0.0
    %2122 = vmatpush1.msra.mxu0 0.0
    %2123 = vmatprep.subr.mxu0 0.0
    %2124 = vmatpush1.msra.mxu0 0.0
    %2125 = vmatprep.subr.mxu0 0.0
    %2126 = vmatpush1.msra.mxu0 0.0
    %2127 = vmatprep.subr.mxu0 0.0
    %2128 = vmatpush1.msra.mxu0 0.0
    %2129 = vmatprep.subr.mxu0 0.0
    %2130 = vmatpush1.msra.mxu0 0.0
    %2131 = vmatprep.subr.mxu0 0.0
    %2132 = vmatpush1.msra.mxu0 0.0
    %2133 = vmatprep.subr.mxu0 0.0
    %2134 = vmatpush1.msra.mxu0 0.0
    %2135 = vmatprep.subr.mxu0 0.0
    %2136 = vmatpush1.msra.mxu0 0.0
    %2137 = vmatprep.subr.mxu0 0.0
    %2138 = vmatpush1.msra.mxu0 0.0
    %2139 = vmatprep.subr.mxu0 0.0
    %2140 = vmatpush1.msra.mxu0 0.0
    %2141 = vmatprep.subr.mxu0 0.0
    %2142 = vmatpush1.msra.mxu0 0.0
    %2143 = vmatprep.subr.mxu0 0.0
    %2144 = vmatpush1.msra.mxu0 0.0
    %2145 = vmatprep.subr.mxu0 0.0
    %2146 = vmatpush1.msra.mxu0 0.0
    %2147 = vmatprep.subr.mxu0 0.0
    %2148 = vmatpush1.msra.mxu0 0.0
    %2149 = vmatprep.subr.mxu0 0.0
    %2150 = vmatpush1.msra.mxu0 0.0
    %2151 = vmatprep.subr.mxu0 0.0
    %2152 = vmatpush1.msra.mxu0 0.0
    %2153 = vmatprep.subr.mxu0 0.0
    %2154 = vmatpush1.msra.mxu0 0.0
    %2155 = vmatprep.subr.mxu0 0.0
    %2156 = vmatpush1.msra.mxu0 0.0
    %2157 = vmatprep.subr.mxu0 0.0
    %2158 = vmatpush1.msra.mxu0 0.0
    %2159 = vmatprep.subr.mxu0 0.0
    %2160 = vmatpush1.msra.mxu0 0.0
    %2161 = vmatprep.subr.mxu0 0.0
    %2162 = vmatpush1.msra.mxu0 0.0
    %2163 = vmatprep.subr.mxu0 0.0
    %2164 = vmatpush1.msra.mxu0 0.0
    %2165 = vmatprep.subr.mxu0 0.0
    %2166 = vmatpush1.msra.mxu0 0.0
    %2167 = vmatprep.subr.mxu0 0.0
    %2168 = vmatpush1.msra.mxu0 0.0
    %2169 = vmatprep.subr.mxu0 0.0
    %2170 = vmatpush1.msra.mxu0 0.0
    %2171 = vmatprep.subr.mxu0 0.0
    %2172 = vmatpush1.msra.mxu0 0.0
    %2173 = vmatprep.subr.mxu0 0.0
    %2174 = vmatpush1.msra.mxu0 0.0
    %2175 = vmatprep.subr.mxu0 0.0
    %2176 = vmatpush1.msra.mxu0 0.0
    %2177 = vmatprep.mubr.f32.mxu0 0.0
    %2178 = vmatmul.mubr.f32.gmra.mrb[0].mxu0 %v2111
    %v2179 = vpop.f32.mrb[0].mxu0
    %v2180 = vadd.f32 %v2027, %v2179
    %v2181 = vpop.f32.mrb[0].mxu0
    %2182 = vdwg.mxu0
    %v2183 = vld [vmem:[%s8 + $0x1] sm:$0x1]
    %v2184 = vld [vmem:[%s9 + $0x1] sm:$0x1]
    %v2185 = vsel %vm218, %v2180, 0.0
    %2186 = vadd.xlane.f32.xlu0 %v2185
    %v2187 = vpop.xlane.xlu0 %2186
    %v2188 = vmul.f32 %v2187, %v2007
    %v2189 = vsub.f32 %v2180, %v2188
    %v2190 = vmul.f32 %v2189, %v2189
    %v2191 = vsel %vm218, %v2190, 0.0
    %2192 = vadd.xlane.f32.xlu0 %v2191
    %v2193 = vpop.xlane.xlu0 %2192
    %v2194 = vmul.f32 %v2193, %v2007
    %v2195 = vadd.f32 %v2194, 1e-05
    %v2196 = vrsqrt.pop %v2195
    %v2197 = vmul.f32 %v2189, %v2196
    %v2198 = vlaneseq
    %v2199 = vshrl.u32 %v2198, 7
    %v2200 = vsub.s32 0, %v2199
    %v2201 = vrot.slane %v2183, %v2200
    %v2202 = vmul.f32 %v2197, %v2201
    %v2203 = vlaneseq
    %v2204 = vshrl.u32 %v2203, 7
    %v2205 = vsub.s32 0, %v2204
    %v2206 = vrot.slane %v2184, %v2205
    %v2207 = vadd.f32 %v2202, %v2206
    %2208 = vst.msk [vmem:[#allocation2] sm:$0xff] %vm218, %v2207
    // Predicated region
    $region42: #{tpu_custom_call.1} parent=1 // pred_check
      _
    $region43: #{tpu_custom_call.1} parent=1 // pred_check_branch
      %2210 = sbr.rel (0) target = $region45
    $region44: #{tpu_custom_call.1} parent=1 // pred_region
      %s2212 = ssub.s32 128, 128
      %2213 = vsyncadd [#allocation3], %s2212
      %s2215 = sshll.u32 [#allocation2], 4
      %s2216 = int_to_ptr.vmem [resolvable:$true] %s2215
      %2218 = dma.vmem_to_hbm [thread:$0]  %s2216, 128, %s10, [#allocation3]
    $region45: #{tpu_custom_call.1} parent=1 // pred_fallthru
      _
    // Predicated region
    $region46: #{tpu_custom_call.1} parent=1 // pred_check
      _
    $region47: #{tpu_custom_call.1} parent=1 // pred_check_branch
      %2220 = sbr.rel (0) target = $region49
    $region48: #{tpu_custom_call.1} parent=1 // pred_region
      %2221 = dma.done [#allocation3], 128
    $region49: #{tpu_custom_call.1} parent=1 // pred_fallthru
      _
    %2222 = vsyncpa [#allocation3], 1

</llo_original>
